<compile_context>
chip_gen: v6e
topology: v6e:2x2x1
jax: 0.10.0
libtpu: 0.0.40
codegen_flags: <defaults>
</compile_context>

<pallas_src>
import jax
import jax.numpy as jnp
from jax.experimental import pallas as pl
from jax.experimental.pallas import tpu as pltpu

NUM_CLASSES = 18
C_IN = 16  # fusion_conv1 input channels (img channels + point-feature channels)


def fusion_kernel(x1_ref, x2_ref, p_ref, w1_ref, w2_ref, s1_ref, s2_ref, o_ref):
    # Channels-first blocks (points N on the 128-lane axis):
    #   x1_ref: (1, c_img, TN)   img_out block
    #   x2_ref: (1, c_pt,  TN)   fusion_feature block
    #   p_ref : (1, nc,    TN)   points_out block (residual)
    #   w1_ref: (nc, c_img+c_pt) BN-folded fusion_conv1 weight
    #   w2_ref: (nc, nc)         BN-folded fusion_conv2 weight
    #   s1_ref/s2_ref: (nc, 1)   folded conv bias + BN shift
    #   o_ref : (1, nc, TN)
    #
    # All arithmetic in f32 (storage may be bf16); the channel concat of the
    # two encoder streams is a sublane pack feeding ONE MXU matmul.
    x = jnp.concatenate(
        [x1_ref[0].astype(jnp.float32), x2_ref[0].astype(jnp.float32)], axis=0)

    # 1x1 Conv1d + BN (folded) == matmul over channels on the MXU.
    h = jnp.dot(w1_ref[...], x,
                preferred_element_type=jnp.float32,
                precision=jax.lax.Precision.HIGHEST) + s1_ref[...]
    # ReLU + residual add of points_out (f32 elementwise path).
    h = jnp.maximum(h, 0.0) + p_ref[0].astype(jnp.float32)

    # Second 1x1 Conv1d + same (shared) BN, folded; then sigmoid.
    h2 = jnp.dot(w2_ref[...], h,
                 preferred_element_type=jnp.float32,
                 precision=jax.lax.Precision.HIGHEST) + s2_ref[...]
    o_ref[0] = jax.nn.sigmoid(h2).astype(o_ref.dtype)


def _pick_tn(B, N, *, max_tn=2048, min_steps=8):
    """Largest lane-aligned N-tile that keeps >= min_steps grid steps."""
    if N <= 128 or B * (N // 128) < min_steps:
        # Tiny problem: one full-N block per batch element (block == full dim
        # is always legal); fixed launch overhead dominates here anyway.
        return N
    cands = [t for t in range(128, min(N, max_tn) + 1, 128) if N % t == 0]
    if not cands:
        return N
    ok = [t for t in cands if B * (N // t) >= min_steps]
    return max(ok) if ok else max(cands)


def fusion_head(img_out, fusion_feature, points_out,
                w1f, w2f, shift1, shift2, *, tn=None, out_dtype=None):
    """Channels-first fusion head.

    img_out:        [B, c_img, N]
    fusion_feature: [B, c_pt,  N]
    points_out:     [B, nc,    N]
    returns:        [B, nc,    N]   (lane-dense)
    """
    B, c_img, N = img_out.shape
    c_pt = fusion_feature.shape[1]
    nc = w2f.shape[0]
    if out_dtype is None:
        out_dtype = img_out.dtype
    if tn is None:
        tn = _pick_tn(B, N)
    tn = min(tn, N)
    assert N % tn == 0, "N must be a multiple of the N-tile (choose tn | N)"
    # Per double-buffered step: (c_img+c_pt+2*nc) * tn * 4B  <~ 0.5 MB at
    # tn=2048 -> far under every generation's scoped-VMEM default.

    grid_spec = pltpu.PrefetchScalarGridSpec(
        num_scalar_prefetch=0,
        grid=(B, pl.cdiv(N, tn)),
        in_specs=[
            pl.BlockSpec((1, c_img, tn), lambda b, n: (b, 0, n)),
            pl.BlockSpec((1, c_pt, tn), lambda b, n: (b, 0, n)),
            pl.BlockSpec((1, nc, tn), lambda b, n: (b, 0, n)),
            pl.BlockSpec((nc, c_img + c_pt), lambda b, n: (0, 0)),
            pl.BlockSpec((nc, nc), lambda b, n: (0, 0)),
            pl.BlockSpec((nc, 1), lambda b, n: (0, 0)),
            pl.BlockSpec((nc, 1), lambda b, n: (0, 0)),
        ],
        out_specs=pl.BlockSpec((1, nc, tn), lambda b, n: (b, 0, n)),
    )
    return pl.pallas_call(
        fusion_kernel,
        out_shape=jax.ShapeDtypeStruct((B, nc, N), out_dtype),
        grid_spec=grid_spec,
        compiler_params=pltpu.CompilerParams(
            dimension_semantics=("parallel", "parallel")),
    )(img_out, fusion_feature, points_out, w1f, w2f, shift1, shift2)


def fusion_model_forward(img_out, fusion_feature, points_out, params, *,
                         tn=None, activation_dtype=None, channels_last=True):
    """Glue: fold BN + biases into weights at trace time; hot path is Pallas.

    img_out:        [B, c_img, N]  (NCW, encoder stand-in)
    fusion_feature: [B, c_pt,  N]  (NCW, encoder stand-in)
    points_out:     [B, nc,    N]  (NCW, as produced by Point_model)
    activation_dtype: optional storage dtype (e.g. jnp.bfloat16) for the large
                      activations / output; in-kernel math stays f32.
    channels_last:  True  -> [B, N, nc] (matches the module's final permute)
                    False -> [B, nc, N] lane-dense kernel output (no extra
                             HBM round-trip; preferred when the consumer can
                             take NCW — see perf review).
    """
    w1, b1, w2, b2, gamma, beta, rmean, rvar, eps = params
    c_img = img_out.shape[1]
    c_pt = fusion_feature.shape[1]
    nc = w1.shape[0]
    assert c_img + c_pt == w1.shape[1], "cat([img_out, fus_feat]) channel mismatch"
    assert points_out.shape[1] == nc == w2.shape[0] == w2.shape[1]

    # Eval-mode BatchNorm1d folded into scale/shift; the same BN instance is
    # applied after both convs in the reference module.
    inv_std = 1.0 / jnp.sqrt(rvar + eps)
    bn_scale = gamma * inv_std                                   # (nc,)
    bn_shift = beta - rmean * bn_scale                           # (nc,)

    # Fold BN scale and conv bias into weights/shifts (kept in f32: tiny).
    w1f = (bn_scale[:, None] * w1).astype(jnp.float32)           # (nc, 16)
    w2f = (bn_scale[:, None] * w2).astype(jnp.float32)           # (nc, nc)
    shift1 = (bn_scale * b1 + bn_shift)[:, None].astype(jnp.float32)  # (nc, 1)
    shift2 = (bn_scale * b2 + bn_shift)[:, None].astype(jnp.float32)  # (nc, 1)

    if activation_dtype is not None:
        img_out = img_out.astype(activation_dtype)
        fusion_feature = fusion_feature.astype(activation_dtype)
        points_out = points_out.astype(activation_dtype)

    out_cf = fusion_head(img_out, fusion_feature, points_out,
                         w1f, w2f, shift1, shift2,
                         tn=tn, out_dtype=img_out.dtype)          # [B, nc, N]
    if channels_last:
        # Module's trailing `.permute(0, 2, 1)`; layout plumbing only — skip it
        # with channels_last=False when the consumer accepts NCW.
        return jnp.transpose(out_cf, (0, 2, 1))                   # [B, N, nc]
    return out_cf


def reference_forward(img_out, fusion_feature, points_out, params):
    """Pure-JAX mirror of the PyTorch fusion head (eval-mode BN)."""
    w1, b1, w2, b2, gamma, beta, rmean, rvar, eps = params
    x = jnp.concatenate([img_out, fusion_feature], axis=1)        # [B, 16, N]

    def bn(y):  # y: [B, C, N]
        return ((y - rmean[None, :, None]) / jnp.sqrt(rvar[None, :, None] + eps)
                * gamma[None, :, None] + beta[None, :, None])

    hp = jax.lax.Precision.HIGHEST
    h = jnp.einsum("oc,bcn->bon", w1, x, precision=hp) + b1[None, :, None]
    h = jnp.maximum(bn(h), 0.0)
    h = h + points_out
    h2 = jnp.einsum("oc,bcn->bon", w2, h, precision=hp) + b2[None, :, None]
    out = jax.nn.sigmoid(bn(h2))
    return jnp.transpose(out, (0, 2, 1))                          # [B, N, nc]


if __name__ == "__main__":
    key = jax.random.PRNGKey(0)
    B, N = 2, 1024
    c_img, c_pt = 8, 8          # concat -> 16 channels
    nc = NUM_CLASSES

    ks = jax.random.split(key, 11)
    # Encoder outputs (stand-ins for ResNet / Point_model — see TODO above),
    # in their native channels-first NCW layout.
    img_out = jax.random.normal(ks[0], (B, c_img, N), jnp.float32)
    fusion_feature = jax.random.normal(ks[1], (B, c_pt, N), jnp.float32)
    points_out = jax.random.normal(ks[2], (B, nc, N), jnp.float32)

    # Fusion-head parameters (Conv1d k=1 weights, shared BatchNorm1d stats).
    w1 = jax.random.normal(ks[3], (nc, C_IN), jnp.float32) * 0.1
    b1 = jax.random.normal(ks[4], (nc,), jnp.float32) * 0.1
    w2 = jax.random.normal(ks[5], (nc, nc), jnp.float32) * 0.1
    b2 = jax.random.normal(ks[6], (nc,), jnp.float32) * 0.1
    gamma = 1.0 + 0.1 * jax.random.normal(ks[7], (nc,), jnp.float32)
    beta = 0.1 * jax.random.normal(ks[8], (nc,), jnp.float32)
    rmean = 0.1 * jax.random.normal(ks[9], (nc,), jnp.float32)
    rvar = jnp.abs(1.0 + 0.1 * jax.random.normal(ks[10], (nc,), jnp.float32))
    eps = 1e-5
    params = (w1, b1, w2, b2, gamma, beta, rmean, rvar, eps)

    ref = reference_forward(img_out, fusion_feature, points_out, params)

    # f32 storage path (default, auto-picked N-tile).
    out = fusion_model_forward(img_out, fusion_feature, points_out, params)
    out = jax.block_until_ready(out)
    assert out.shape == (B, N, nc)
    assert jnp.allclose(out, ref, atol=1e-5, rtol=1e-5), "f32 mismatch vs reference"

    # bf16 activation-storage path (halves HBM traffic; f32 math in-kernel).
    out_bf16 = fusion_model_forward(img_out, fusion_feature, points_out, params,
                                    activation_dtype=jnp.bfloat16)
    out_bf16 = jax.block_until_ready(out_bf16)
    assert out_bf16.dtype == jnp.bfloat16
    assert jnp.allclose(out_bf16.astype(jnp.float32), ref, atol=3e-2), \
        "bf16 mismatch vs reference"

    # Lane-dense NCW output path (no wrapper transpose).
    out_cf = fusion_model_forward(img_out, fusion_feature, points_out, params,
                                  channels_last=False)
    out_cf = jax.block_until_ready(out_cf)
    assert out_cf.shape == (B, nc, N)
    assert jnp.allclose(jnp.transpose(out_cf, (0, 2, 1)), ref, atol=1e-5, rtol=1e-5)

    print("KERNEL_OK")
</pallas_src>

<mosaic_0001>
module attributes {stable_mosaic.version = 11 : i64} {
  func.func @fusion_kernel(%arg0: i32, %arg1: i32, %arg2: memref<1x8x256xf32, #tpu.memory_space<vmem>>, %arg3: memref<1x8x256xf32, #tpu.memory_space<vmem>>, %arg4: memref<1x18x256xf32, #tpu.memory_space<vmem>>, %arg5: memref<18x16xf32, #tpu.memory_space<vmem>>, %arg6: memref<18x18xf32, #tpu.memory_space<vmem>>, %arg7: memref<18x1xf32, #tpu.memory_space<vmem>>, %arg8: memref<18x1xf32, #tpu.memory_space<vmem>>, %arg9: memref<1x18x256xf32, #tpu.memory_space<vmem>>) attributes {dimension_semantics = [#tpu.dimension_semantics<parallel>, #tpu.dimension_semantics<parallel>], iteration_bounds = array<i64: 2, 4>, scalar_prefetch = 0 : i64, scratch_operands = 0 : i64, tpu.core_type = #tpu.core_type<tc>, window_params = [{transform_indices = @transform_0, window_bounds = array<i64: 1, 8, 256>}, {transform_indices = @transform_1, window_bounds = array<i64: 1, 8, 256>}, {transform_indices = @transform_2, window_bounds = array<i64: 1, 18, 256>}, {pipeline_mode = #tpu.pipeline_mode<synchronous>, transform_indices = @transform_3, window_bounds = array<i64: 18, 16>}, {pipeline_mode = #tpu.pipeline_mode<synchronous>, transform_indices = @transform_4, window_bounds = array<i64: 18, 18>}, {pipeline_mode = #tpu.pipeline_mode<synchronous>, transform_indices = @transform_5, window_bounds = array<i64: 18, 1>}, {pipeline_mode = #tpu.pipeline_mode<synchronous>, transform_indices = @transform_6, window_bounds = array<i64: 18, 1>}, {transform_indices = @transform_7, window_bounds = array<i64: 1, 18, 256>}]} {
    %c0 = arith.constant 0 : index
    %c0_0 = arith.constant 0 : index
    %c0_1 = arith.constant 0 : index
    %0 = vector.load %arg2[%c0, %c0_0, %c0_1] : memref<1x8x256xf32, #tpu.memory_space<vmem>>, vector<1x8x256xf32>
    %1 = vector.shape_cast %0 : vector<1x8x256xf32> to vector<8x256xf32>
    %c0_2 = arith.constant 0 : index
    %c0_3 = arith.constant 0 : index
    %c0_4 = arith.constant 0 : index
    %2 = vector.load %arg3[%c0_2, %c0_3, %c0_4] : memref<1x8x256xf32, #tpu.memory_space<vmem>>, vector<1x8x256xf32>
    %3 = vector.shape_cast %2 : vector<1x8x256xf32> to vector<8x256xf32>
    %4 = tpu.concatenate %1, %3 in 0 : vector<8x256xf32>, vector<8x256xf32> -> vector<16x256xf32>
    %c0_5 = arith.constant 0 : index
    %c0_6 = arith.constant 0 : index
    %5 = vector.load %arg5[%c0_5, %c0_6] : memref<18x16xf32, #tpu.memory_space<vmem>>, vector<18x16xf32>
    %cst = arith.constant dense<0.000000e+00> : vector<18x256xf32>
    %6 = tpu.matmul %5, %4, %cst {dimension_numbers = #tpu.dot_dimension_numbers<[1], [0], [0], [1], [0, 0, 1, 1], [], []>, precision = #tpu.contract_precision<fp32>} : vector<18x16xf32>, vector<16x256xf32>, vector<18x256xf32> -> vector<18x256xf32>
    %c0_7 = arith.constant 0 : index
    %c0_8 = arith.constant 0 : index
    %7 = vector.load %arg7[%c0_7, %c0_8] : memref<18x1xf32, #tpu.memory_space<vmem>>, vector<18x1xf32>
    %8 = vector.broadcast %7 : vector<18x1xf32> to vector<18x256xf32>
    %9 = arith.addf %6, %8 : vector<18x256xf32>
    %cst_9 = arith.constant 0.000000e+00 : f32
    %10 = vector.broadcast %cst_9 : f32 to vector<18x256xf32>
    %11 = arith.maximumf %9, %10 : vector<18x256xf32>
    %c0_10 = arith.constant 0 : index
    %c0_11 = arith.constant 0 : index
    %c0_12 = arith.constant 0 : index
    %12 = vector.load %arg4[%c0_10, %c0_11, %c0_12] : memref<1x18x256xf32, #tpu.memory_space<vmem>>, vector<1x18x256xf32>
    %13 = vector.shape_cast %12 : vector<1x18x256xf32> to vector<18x256xf32>
    %14 = arith.addf %11, %13 : vector<18x256xf32>
    %c0_13 = arith.constant 0 : index
    %c0_14 = arith.constant 0 : index
    %15 = vector.load %arg6[%c0_13, %c0_14] : memref<18x18xf32, #tpu.memory_space<vmem>>, vector<18x18xf32>
    %cst_15 = arith.constant dense<0.000000e+00> : vector<18x256xf32>
    %16 = tpu.matmul %15, %14, %cst_15 {dimension_numbers = #tpu.dot_dimension_numbers<[1], [0], [0], [1], [0, 0, 1, 1], [], []>, precision = #tpu.contract_precision<fp32>} : vector<18x18xf32>, vector<18x256xf32>, vector<18x256xf32> -> vector<18x256xf32>
    %c0_16 = arith.constant 0 : index
    %c0_17 = arith.constant 0 : index
    %17 = vector.load %arg8[%c0_16, %c0_17] : memref<18x1xf32, #tpu.memory_space<vmem>>, vector<18x1xf32>
    %18 = vector.broadcast %17 : vector<18x1xf32> to vector<18x256xf32>
    %19 = arith.addf %16, %18 : vector<18x256xf32>
    %20 = arith.negf %19 : vector<18x256xf32>
    %21 = math.exp %20 : vector<18x256xf32>
    %cst_18 = arith.constant 1.000000e+00 : f32
    %22 = vector.broadcast %cst_18 : f32 to vector<18x256xf32>
    %23 = arith.addf %22, %21 : vector<18x256xf32>
    %24 = arith.divf %22, %23 : vector<18x256xf32>
    %c0_19 = arith.constant 0 : index
    %c0_20 = arith.constant 0 : index
    %c0_21 = arith.constant 0 : index
    %25 = vector.load %arg9[%c0_19, %c0_20, %c0_21] : memref<1x18x256xf32, #tpu.memory_space<vmem>>, vector<1x18x256xf32>
    %26 = vector.shape_cast %25 : vector<1x18x256xf32> to vector<18x256xf32>
    %27 = vector.shape_cast %24 : vector<18x256xf32> to vector<1x18x256xf32>
    tpu.vector_store %arg9[%c0_19, %c0_20, %c0_21], %27 {strides = array<i32>} : memref<1x18x256xf32, #tpu.memory_space<vmem>>, vector<1x18x256xf32>,
    return
  }
  func.func @transform_0(%arg0: i32, %arg1: i32) -> (i32, i32, i32) {
    %c0_i32 = arith.constant 0 : i32
    %c0_i32_0 = arith.constant 0 : i32
    return %arg0, %c0_i32, %arg1 : i32, i32, i32
  }
  func.func @transform_1(%arg0: i32, %arg1: i32) -> (i32, i32, i32) {
    %c0_i32 = arith.constant 0 : i32
    %c0_i32_0 = arith.constant 0 : i32
    return %arg0, %c0_i32, %arg1 : i32, i32, i32
  }
  func.func @transform_2(%arg0: i32, %arg1: i32) -> (i32, i32, i32) {
    %c0_i32 = arith.constant 0 : i32
    %c0_i32_0 = arith.constant 0 : i32
    return %arg0, %c0_i32, %arg1 : i32, i32, i32
  }
  func.func @transform_3(%arg0: i32, %arg1: i32) -> (i32, i32) {
    %c0_i32 = arith.constant 0 : i32
    %c0_i32_0 = arith.constant 0 : i32
    %c0_i32_1 = arith.constant 0 : i32
    return %c0_i32, %c0_i32_0 : i32, i32
  }
  func.func @transform_4(%arg0: i32, %arg1: i32) -> (i32, i32) {
    %c0_i32 = arith.constant 0 : i32
    %c0_i32_0 = arith.constant 0 : i32
    %c0_i32_1 = arith.constant 0 : i32
    return %c0_i32, %c0_i32_0 : i32, i32
  }
  func.func @transform_5(%arg0: i32, %arg1: i32) -> (i32, i32) {
    %c0_i32 = arith.constant 0 : i32
    %c0_i32_0 = arith.constant 0 : i32
    %c0_i32_1 = arith.constant 0 : i32
    return %c0_i32, %c0_i32_0 : i32, i32
  }
  func.func @transform_6(%arg0: i32, %arg1: i32) -> (i32, i32) {
    %c0_i32 = arith.constant 0 : i32
    %c0_i32_0 = arith.constant 0 : i32
    %c0_i32_1 = arith.constant 0 : i32
    return %c0_i32, %c0_i32_0 : i32, i32
  }
  func.func @transform_7(%arg0: i32, %arg1: i32) -> (i32, i32, i32) {
    %c0_i32 = arith.constant 0 : i32
    %c0_i32_0 = arith.constant 0 : i32
    return %arg0, %c0_i32, %arg1 : i32, i32, i32
  }
}

</mosaic_0001>

<llo_original>
// kernel: tpu_custom_call.1
$region0: #{tpu_custom_call.1}
  #allocation0 [shape = 'u32[]', space=smem, size = 0x4, offset = 0x4, fixed_abs, tag = 'smem constant byte address 0x4 - core index']
  #allocation1 [shape = 'u32[144,128]{1,0:T(1,128)}', space=vmem, size = 0x12000, scoped, tag = 'internal scratch']
  %s0 = inlined_call_operand.vmem [shape: f32[2,8,1024], index: 0, kind: input, shape index: {}]
  %s1 = inlined_call_operand.vmem [shape: f32[2,8,1024], index: 1, kind: input, shape index: {}]
  %s2 = inlined_call_operand.vmem [shape: f32[2,18,1024], index: 2, kind: input, shape index: {}]
  %s3 = inlined_call_operand.vmem [shape: f32[18,16], index: 3, kind: input, shape index: {}]
  %s4 = inlined_call_operand.vmem [shape: f32[18,18], index: 4, kind: input, shape index: {}]
  %s5 = inlined_call_operand.vmem [shape: f32[18,1], index: 5, kind: input, shape index: {}]
  %s6 = inlined_call_operand.vmem [shape: f32[18,1], index: 6, kind: input, shape index: {}]
  %s7 = inlined_call_operand.vmem [shape: f32[2,18,1024], index: 7, kind: output, shape index: {}]
  %s8 = sld [smem:[#allocation0]]
  $region103: #{tpu_custom_call.1} parent=0
    _
  %s10 = ssub.s32 1, %s8
  %s11 = scalar_select 0, %s10, %s8
  $region1: #{tpu_custom_call.1} parent=0
    #allocation2 [shape = 'u8[49152]{0}', space=vmem, size = 0xc000, scoped, tag = 'input window, operand 2']
    #allocation3 [shape = 'u8[49152]{0}', space=vmem, size = 0xc000, scoped, tag = 'output window, operand 0']
    loop: start=0, step=1, limit=10
    $region2: #{tpu_custom_call.1} parent=1 // loop_pre_header
      _
    $region3: #{tpu_custom_call.1} parent=1 // loop_header
      %s13 = sphi 0, %s17
      %p14 = scmp.ge.s32.totalorder %s13, 10
      %s20 = sphi 0, %s32
      %s21 = sphi 0, %s28
      %s22 = sphi 0, %s20
      %s23 = sphi 0, %s21
      %s24 = sphi 0, %s22
      %s25 = sphi 0, %s23
      %s37 = sphi 0, %s39
      %s40 = sphi 0, %s37
      %s41 = sphi 0, %s40
      %s57 = sphi 0, %s41
      %s65 = sphi 0, %s67
      %s68 = sphi 0, %s65
      %s69 = sphi 0, %s68
      %s85 = sphi 0, %s69
      %s93 = sphi 0, %s95
      %s96 = sphi 0, %s93
      %s97 = sphi 0, %s96
      %s113 = sphi 0, %s97
      %s117 = sphi 0, %s117
      %s119 = sphi 0, %s117
      %s120 = sphi 0, %s119
      %s134 = sphi 0, %s120
      %s138 = sphi 0, %s138
      %s140 = sphi 0, %s138
      %s141 = sphi 0, %s140
      %s155 = sphi 0, %s141
      %s159 = sphi 0, %s159
      %s161 = sphi 0, %s159
      %s162 = sphi 0, %s161
      %s176 = sphi 0, %s162
      %s180 = sphi 0, %s180
      %s182 = sphi 0, %s180
      %s183 = sphi 0, %s182
      %s197 = sphi 0, %s183
      %s205 = sphi 0, %s207
      %s208 = sphi 0, %s205
      %s209 = sphi 0, %s208
      %s225 = sphi 0, %s209
    $region4: #{tpu_custom_call.1} parent=1 // loop_header_branch
      %16 = sbr.rel (%p14) target = $region8
    $region5: #{tpu_custom_call.1} parent=1 // loop_body
      %s18 = ssub.s32 %s13, 1
      %s19 = ssub.s32 %s13, 2
      %s26 = sadd.s32 1, %s21
      %p27 = scmp.ge.s32.totalorder %s26, 4
      %s28 = scalar_select %p27, 0, %s26
      %s29 = sadd.s32 1, %s20
      %s30 = scalar_select %p27, %s29, %s20
      %p31 = scmp.ge.s32.totalorder %s30, 2
      %s32 = scalar_select %p31, 0, %s30
      %s33 = ssub.s32 %s20, %s32
      %s34 = ssub.s32 %s21, %s28
      %s35 = sor.u32 %s33, %s34
      %p36 = scmp.eq.s32.totalorder %s35, 0
      %s38 = sadd.s32 %s37, 1
      %s39 = scalar_select %p36, %s37, %s38
      %p42 = pneg %p36
      %p43 = scmp.eq.s32.totalorder %s13, 7
      %p44 = por %p42, %p43
      %p45 = scmp.ne.s32.totalorder %s37, %s40
      %p46 = scmp.eq.s32.totalorder %s13, 0
      %p47 = por %p45, %p46
      %p48 = scmp.ne.s32.totalorder %s37, %s40
      %p49 = scmp.eq.s32.totalorder %s18, 7
      %p50 = por %p48, %p49
      %p51 = scmp.ne.s32.totalorder %s40, %s41
      %p52 = scmp.eq.s32.totalorder %s18, 0
      %p53 = por %p51, %p52
      %p54 = scmp.ne.s32.totalorder %s40, %s41
      %p55 = scmp.eq.s32.totalorder %s19, 7
      %p56 = por %p54, %p55
      %p58 = scmp.ne.s32.totalorder %s41, %s57
      %p59 = scmp.eq.s32.totalorder %s19, 0
      %p60 = por %p58, %p59
      %s61 = ssub.s32 %s20, %s32
      %s62 = ssub.s32 %s21, %s28
      %s63 = sor.u32 %s61, %s62
      %p64 = scmp.eq.s32.totalorder %s63, 0
      %s66 = sadd.s32 %s65, 1
      %s67 = scalar_select %p64, %s65, %s66
      %p70 = pneg %p64
      %p71 = scmp.eq.s32.totalorder %s13, 7
      %p72 = por %p70, %p71
      %p73 = scmp.ne.s32.totalorder %s65, %s68
      %p74 = scmp.eq.s32.totalorder %s13, 0
      %p75 = por %p73, %p74
      %p76 = scmp.ne.s32.totalorder %s65, %s68
      %p77 = scmp.eq.s32.totalorder %s18, 7
      %p78 = por %p76, %p77
      %p79 = scmp.ne.s32.totalorder %s68, %s69
      %p80 = scmp.eq.s32.totalorder %s18, 0
      %p81 = por %p79, %p80
      %p82 = scmp.ne.s32.totalorder %s68, %s69
      %p83 = scmp.eq.s32.totalorder %s19, 7
      %p84 = por %p82, %p83
      %p86 = scmp.ne.s32.totalorder %s69, %s85
      %p87 = scmp.eq.s32.totalorder %s19, 0
      %p88 = por %p86, %p87
      %s89 = ssub.s32 %s20, %s32
      %s90 = ssub.s32 %s21, %s28
      %s91 = sor.u32 %s89, %s90
      %p92 = scmp.eq.s32.totalorder %s91, 0
      %s94 = sadd.s32 %s93, 1
      %s95 = scalar_select %p92, %s93, %s94
      %p98 = pneg %p92
      %p99 = scmp.eq.s32.totalorder %s13, 7
      %p100 = por %p98, %p99
      %p101 = scmp.ne.s32.totalorder %s93, %s96
      %p102 = scmp.eq.s32.totalorder %s13, 0
      %p103 = por %p101, %p102
      %p104 = scmp.ne.s32.totalorder %s93, %s96
      %p105 = scmp.eq.s32.totalorder %s18, 7
      %p106 = por %p104, %p105
      %p107 = scmp.ne.s32.totalorder %s96, %s97
      %p108 = scmp.eq.s32.totalorder %s18, 0
      %p109 = por %p107, %p108
      %p110 = scmp.ne.s32.totalorder %s96, %s97
      %p111 = scmp.eq.s32.totalorder %s19, 7
      %p112 = por %p110, %p111
      %p114 = scmp.ne.s32.totalorder %s97, %s113
      %p115 = scmp.eq.s32.totalorder %s19, 0
      %p116 = por %p114, %p115
      %s118 = sadd.s32 %s117, 1
      %p121 = scmp.eq.s32.totalorder %s13, 7
      %p122 = scmp.ne.s32.totalorder %s117, %s119
      %p123 = scmp.eq.s32.totalorder %s13, 0
      %p124 = por %p122, %p123
      %p125 = scmp.ne.s32.totalorder %s117, %s119
      %p126 = scmp.eq.s32.totalorder %s18, 7
      %p127 = por %p125, %p126
      %p128 = scmp.ne.s32.totalorder %s119, %s120
      %p129 = scmp.eq.s32.totalorder %s18, 0
      %p130 = por %p128, %p129
      %p131 = scmp.ne.s32.totalorder %s119, %s120
      %p132 = scmp.eq.s32.totalorder %s19, 7
      %p133 = por %p131, %p132
      %p135 = scmp.ne.s32.totalorder %s120, %s134
      %p136 = scmp.eq.s32.totalorder %s19, 0
      %p137 = por %p135, %p136
      %s139 = sadd.s32 %s138, 1
      %p142 = scmp.eq.s32.totalorder %s13, 7
      %p143 = scmp.ne.s32.totalorder %s138, %s140
      %p144 = scmp.eq.s32.totalorder %s13, 0
      %p145 = por %p143, %p144
      %p146 = scmp.ne.s32.totalorder %s138, %s140
      %p147 = scmp.eq.s32.totalorder %s18, 7
      %p148 = por %p146, %p147
      %p149 = scmp.ne.s32.totalorder %s140, %s141
      %p150 = scmp.eq.s32.totalorder %s18, 0
      %p151 = por %p149, %p150
      %p152 = scmp.ne.s32.totalorder %s140, %s141
      %p153 = scmp.eq.s32.totalorder %s19, 7
      %p154 = por %p152, %p153
      %p156 = scmp.ne.s32.totalorder %s141, %s155
      %p157 = scmp.eq.s32.totalorder %s19, 0
      %p158 = por %p156, %p157
      %s160 = sadd.s32 %s159, 1
      %p163 = scmp.eq.s32.totalorder %s13, 7
      %p164 = scmp.ne.s32.totalorder %s159, %s161
      %p165 = scmp.eq.s32.totalorder %s13, 0
      %p166 = por %p164, %p165
      %p167 = scmp.ne.s32.totalorder %s159, %s161
      %p168 = scmp.eq.s32.totalorder %s18, 7
      %p169 = por %p167, %p168
      %p170 = scmp.ne.s32.totalorder %s161, %s162
      %p171 = scmp.eq.s32.totalorder %s18, 0
      %p172 = por %p170, %p171
      %p173 = scmp.ne.s32.totalorder %s161, %s162
      %p174 = scmp.eq.s32.totalorder %s19, 7
      %p175 = por %p173, %p174
      %p177 = scmp.ne.s32.totalorder %s162, %s176
      %p178 = scmp.eq.s32.totalorder %s19, 0
      %p179 = por %p177, %p178
      %s181 = sadd.s32 %s180, 1
      %p184 = scmp.eq.s32.totalorder %s13, 7
      %p185 = scmp.ne.s32.totalorder %s180, %s182
      %p186 = scmp.eq.s32.totalorder %s13, 0
      %p187 = por %p185, %p186
      %p188 = scmp.ne.s32.totalorder %s180, %s182
      %p189 = scmp.eq.s32.totalorder %s18, 7
      %p190 = por %p188, %p189
      %p191 = scmp.ne.s32.totalorder %s182, %s183
      %p192 = scmp.eq.s32.totalorder %s18, 0
      %p193 = por %p191, %p192
      %p194 = scmp.ne.s32.totalorder %s182, %s183
      %p195 = scmp.eq.s32.totalorder %s19, 7
      %p196 = por %p194, %p195
      %p198 = scmp.ne.s32.totalorder %s183, %s197
      %p199 = scmp.eq.s32.totalorder %s19, 0
      %p200 = por %p198, %p199
      %s201 = ssub.s32 %s20, %s32
      %s202 = ssub.s32 %s21, %s28
      %s203 = sor.u32 %s201, %s202
      %p204 = scmp.eq.s32.totalorder %s203, 0
      %s206 = sadd.s32 %s205, 1
      %s207 = scalar_select %p204, %s205, %s206
      %p210 = pneg %p204
      %p211 = scmp.eq.s32.totalorder %s13, 7
      %p212 = por %p210, %p211
      %p213 = scmp.ne.s32.totalorder %s205, %s208
      %p214 = scmp.eq.s32.totalorder %s13, 0
      %p215 = por %p213, %p214
      %p216 = scmp.ne.s32.totalorder %s205, %s208
      %p217 = scmp.eq.s32.totalorder %s18, 7
      %p218 = por %p216, %p217
      %p219 = scmp.ne.s32.totalorder %s208, %s209
      %p220 = scmp.eq.s32.totalorder %s18, 0
      %p221 = por %p219, %p220
      %p222 = scmp.ne.s32.totalorder %s208, %s209
      %p223 = scmp.eq.s32.totalorder %s19, 7
      %p224 = por %p222, %p223
      %p226 = scmp.ne.s32.totalorder %s209, %s225
      %p227 = scmp.eq.s32.totalorder %s19, 0
      %p228 = por %p226, %p227
      %p229 = scmp.le.s32.totalorder 1, %s13
      %p230 = scmp.lt.s32.totalorder %s13, 9
      %p231 = pnand %p229, %p230
      %p232 = pneg %p231
      // Predicated region
      $region9: #{tpu_custom_call.1} parent=5 // pred_check
        _
      $region10: #{tpu_custom_call.1} parent=5 // pred_check_branch
        %234 = sbr.rel (%p231) target = $region12
      $region11: #{tpu_custom_call.1} parent=5 // pred_region
        %s235 = ssub.s32 %s13, 1
        // Predicated region
        $region13: #{tpu_custom_call.1} parent=11 // pred_check
          %p236 = pneg %p130
        $region14: #{tpu_custom_call.1} parent=11 // pred_check_branch
          %238 = sbr.rel (%p236) target = $region16
        $region15: #{tpu_custom_call.1} parent=11 // pred_region
          _
        $region16: #{tpu_custom_call.1} parent=11 // pred_fallthru
          _
        // Predicated region
        $region17: #{tpu_custom_call.1} parent=11 // pred_check
          %p239 = pneg %p151
        $region18: #{tpu_custom_call.1} parent=11 // pred_check_branch
          %241 = sbr.rel (%p239) target = $region20
        $region19: #{tpu_custom_call.1} parent=11 // pred_region
          _
        $region20: #{tpu_custom_call.1} parent=11 // pred_fallthru
          _
        // Predicated region
        $region21: #{tpu_custom_call.1} parent=11 // pred_check
          %p242 = pneg %p172
        $region22: #{tpu_custom_call.1} parent=11 // pred_check_branch
          %244 = sbr.rel (%p242) target = $region24
        $region23: #{tpu_custom_call.1} parent=11 // pred_region
          _
        $region24: #{tpu_custom_call.1} parent=11 // pred_fallthru
          _
        // Predicated region
        $region25: #{tpu_custom_call.1} parent=11 // pred_check
          %p245 = pneg %p193
        $region26: #{tpu_custom_call.1} parent=11 // pred_check_branch
          %247 = sbr.rel (%p245) target = $region28
        $region27: #{tpu_custom_call.1} parent=11 // pred_region
          _
        $region28: #{tpu_custom_call.1} parent=11 // pred_fallthru
          _
      $region12: #{tpu_custom_call.1} parent=5 // pred_fallthru
        _
      %p248 = scmp.lt.s32.totalorder %s13, 8
      // Predicated region
      $region29: #{tpu_custom_call.1} parent=5 // pred_check
        %p249 = pneg %p248
      $region30: #{tpu_custom_call.1} parent=5 // pred_check_branch
        %251 = sbr.rel (%p249) target = $region32
      $region31: #{tpu_custom_call.1} parent=5 // pred_region
        // Predicated region
        $region33: #{tpu_custom_call.1} parent=31 // pred_check
          %p252 = pneg %p47
        $region34: #{tpu_custom_call.1} parent=31 // pred_check_branch
          %254 = sbr.rel (%p252) target = $region36
        $region35: #{tpu_custom_call.1} parent=31 // pred_region
          %s255 = smul.u32 2, %s21
          %p256 = scmp.lt.s32.totalorder %s20, 1
          %s257 = scalar_select %p256, %s20, 1
          %p258 = scmp.lt.s32.totalorder %s255, 7
          %s259 = scalar_select %p258, %s255, 7
          %s260 = smul.addr %s257, 8
          %s261 = sadd.s32 %s259, %s260
          %s262 = smul.addr %s261, 8
          %s263 = scalar_lea.vmem %s0, %s262
          %s264 = smul.u32 2, %s21
        $region36: #{tpu_custom_call.1} parent=31 // pred_fallthru
          _
        // Predicated region
        $region37: #{tpu_custom_call.1} parent=31 // pred_check
          %p265 = pneg %p75
        $region38: #{tpu_custom_call.1} parent=31 // pred_check_branch
          %267 = sbr.rel (%p265) target = $region40
        $region39: #{tpu_custom_call.1} parent=31 // pred_region
          %s268 = smul.u32 2, %s21
          %p269 = scmp.lt.s32.totalorder %s20, 1
          %s270 = scalar_select %p269, %s20, 1
          %p271 = scmp.lt.s32.totalorder %s268, 7
          %s272 = scalar_select %p271, %s268, 7
          %s273 = smul.addr %s270, 8
          %s274 = sadd.s32 %s272, %s273
          %s275 = smul.addr %s274, 8
          %s276 = scalar_lea.vmem %s1, %s275
          %s277 = smul.u32 2, %s21
        $region40: #{tpu_custom_call.1} parent=31 // pred_fallthru
          _
        // Predicated region
        $region41: #{tpu_custom_call.1} parent=31 // pred_check
          %p278 = pneg %p103
        $region42: #{tpu_custom_call.1} parent=31 // pred_check_branch
          %280 = sbr.rel (%p278) target = $region44
        $region43: #{tpu_custom_call.1} parent=31 // pred_region
          %s281 = sand.u32 %s93, 1
          %s282 = sand.u32 %s93, 1
          %s283 = smul.addr %s282, 48
          %s284 = scalar_lea.vmem [#allocation2], %s283
          %s285 = smul.u32 2, %s21
          %s286 = smul.addr %s20, 24
          %s287 = sadd.s32 %s285, %s286
          %s288 = smul.addr %s287, 8
          %s289 = scalar_lea.vmem %s2, %s288
          // Predicated region
          $region45: #{tpu_custom_call.1} parent=43 // pred_check
            _
          $region46: #{tpu_custom_call.1} parent=43 // pred_check_branch
            %291 = sbr.rel (0) target = $region48
          $region47: #{tpu_custom_call.1} parent=43 // pred_region
            // Predicated region
            $region49: #{tpu_custom_call.1} parent=47 // pred_check
              _
            $region50: #{tpu_custom_call.1} parent=47 // pred_check_branch
              %293 = sbr.rel (0) target = $region52
            $region51: #{tpu_custom_call.1} parent=47 // pred_region
              loop: start=0, step=1, limit=1
              $region53: #{tpu_custom_call.1} parent=51 // loop_pre_header
                _
              $region54: #{tpu_custom_call.1} parent=51 // loop_header
                %s295 = sphi 0, %s299
                %p296 = scmp.ge.s32.totalorder %s295, 1
                %s300 = sphi %s289, %s289
                %s301 = sphi %s284, %s284
              $region55: #{tpu_custom_call.1} parent=51 // loop_header_branch
                %298 = sbr.rel (%p296) target = $region59
              $region56: #{tpu_custom_call.1} parent=51 // loop_body
                %v302 = vld [vmem:[%s300] sm:$0xff]
                %303 = vst [vmem:[%s301] sm:$0xff] %v302
                %v304 = vld [vmem:[%s300 + $0x8] sm:$0xff]
                %305 = vst [vmem:[%s301 + $0x8] sm:$0xff] %v304
                %v306 = vld [vmem:[%s300 + $0x40] sm:$0xff]
                %307 = vst [vmem:[%s301 + $0x10] sm:$0xff] %v306
                %v308 = vld [vmem:[%s300 + $0x48] sm:$0xff]
                %309 = vst [vmem:[%s301 + $0x18] sm:$0xff] %v308
                %v310 = vld [vmem:[%s300 + $0x80] sm:$0xff]
                %311 = vst [vmem:[%s301 + $0x20] sm:$0xff] %v310
                %v312 = vld [vmem:[%s300 + $0x88] sm:$0xff]
                %313 = vst [vmem:[%s301 + $0x28] sm:$0xff] %v312
              $region57: #{tpu_custom_call.1} parent=51 // loop_footer
                %s299 = sadd.s32 1, %s295
              $region58: #{tpu_custom_call.1} parent=51 // loop_footer_branch
                %294 = sbr.rel target = $region54
              $region59: #{tpu_custom_call.1} parent=51 // loop_exit
                _
            $region52: #{tpu_custom_call.1} parent=47 // pred_fallthru
              _
            // Predicated region
            $region60: #{tpu_custom_call.1} parent=47 // pred_check
              _
            $region61: #{tpu_custom_call.1} parent=47 // pred_check_branch
              %315 = sbr.rel target = $region63
            $region62: #{tpu_custom_call.1} parent=47 // pred_region
              _
            $region63: #{tpu_custom_call.1} parent=47 // pred_fallthru
              _
          $region48: #{tpu_custom_call.1} parent=43 // pred_fallthru
            _
          %316 = vnop
        $region44: #{tpu_custom_call.1} parent=31 // pred_fallthru
          _
      $region32: #{tpu_custom_call.1} parent=5 // pred_fallthru
        _
      %p317 = scmp.le.s32.totalorder 1, %s13
      %p318 = scmp.lt.s32.totalorder %s13, 9
      %p319 = pnand %p317, %p318
      %p320 = pneg %p319
      // Predicated region
      $region64: #{tpu_custom_call.1} parent=5 // pred_check
        _
      $region65: #{tpu_custom_call.1} parent=5 // pred_check_branch
        %322 = sbr.rel (%p319) target = $region67
      $region66: #{tpu_custom_call.1} parent=5 // pred_region
        %s323 = ssub.s32 %s13, 1
        %s324 = sand.u32 %s96, 1
        %s325 = sand.u32 %s96, 1
        %s326 = smul.addr %s325, 48
        %s327 = scalar_lea.vmem [#allocation2], %s326
        // Predicated region
        $region68: #{tpu_custom_call.1} parent=66 // pred_check
          %p328 = pneg %p109
        $region69: #{tpu_custom_call.1} parent=66 // pred_check_branch
          %330 = sbr.rel (%p328) target = $region71
        $region70: #{tpu_custom_call.1} parent=66 // pred_region
          _
        $region71: #{tpu_custom_call.1} parent=66 // pred_fallthru
          _
        %s331 = smul.u32 2, %s23
        %p332 = scmp.lt.s32.totalorder %s22, 1
        %s333 = scalar_select %p332, %s22, 1
        %p334 = scmp.lt.s32.totalorder %s331, 7
        %s335 = scalar_select %p334, %s331, 7
        %s336 = smul.addr %s333, 8
        %s337 = sadd.s32 %s335, %s336
        %s338 = smul.addr %s337, 8
        %s339 = scalar_lea.vmem %s0, %s338
        %p340 = pneg %p53
        %p341 = pneg %p50
        %s342 = smul.u32 2, %s23
        %p343 = scmp.lt.s32.totalorder %s22, 1
        %s344 = scalar_select %p343, %s22, 1
        %p345 = scmp.lt.s32.totalorder %s342, 7
        %s346 = scalar_select %p345, %s342, 7
        %s347 = smul.addr %s344, 8
        %s348 = sadd.s32 %s346, %s347
        %s349 = smul.addr %s348, 8
        %s350 = scalar_lea.vmem %s1, %s349
        %p351 = pneg %p81
        %p352 = pneg %p78
        %s353 = sand.u32 %s96, 1
        %s354 = sand.u32 %s96, 1
        %s355 = smul.addr %s354, 48
        %s356 = scalar_lea.vmem [#allocation2], %s355
        %p357 = pneg %p109
        %p358 = pneg %p106
        %p359 = pneg %p130
        %p360 = pneg %p127
        %p361 = pneg %p151
        %p362 = pneg %p148
        %p363 = pneg %p172
        %p364 = pneg %p169
        %p365 = pneg %p193
        %p366 = pneg %p190
        %p367 = pneg %p221
        %p368 = pneg %p218
        %s369 = sand.u32 %s208, 1
        %s370 = sand.u32 %s208, 1
        %s371 = smul.addr %s370, 48
        %s372 = scalar_lea.vmem [#allocation3], %s371
        %s373 = smul.u32 2, %s23
        %p374 = scmp.lt.s32.totalorder %s22, 1
        %s375 = scalar_select %p374, %s22, 1
        %p376 = scmp.lt.s32.totalorder %s373, 7
        %s377 = scalar_select %p376, %s373, 7
        %s378 = smul.addr %s375, 8
        %s379 = sadd.s32 %s377, %s378
        %s380 = smul.addr %s379, 8
        %s381 = scalar_lea.vmem %s0, %s380
        %s382 = smul.u32 2, %s23
        %s383 = smul.u32 2, %s23
        %p384 = scmp.lt.s32.totalorder %s22, 1
        %s385 = scalar_select %p384, %s22, 1
        %p386 = scmp.lt.s32.totalorder %s383, 7
        %s387 = scalar_select %p386, %s383, 7
        %s388 = smul.addr %s385, 8
        %s389 = sadd.s32 %s387, %s388
        %s390 = smul.addr %s389, 8
        %s391 = scalar_lea.vmem %s1, %s390
        %s392 = smul.u32 2, %s23
        %s393 = smul.u32 2, %s23
        %s394 = smul.u32 2, %s23
        %v395 = vld [vmem:[%s381] sm:$0xff]
        %v396 = vld [vmem:[%s381 + $0x8] sm:$0xff]
        %v397 = vld [vmem:[%s391] sm:$0xff]
        %v398 = vld [vmem:[%s391 + $0x8] sm:$0xff]
        %v399 = vld [vmem:[%s3] sm:$0xff]
        %v400 = vld [vmem:[%s3 + $0x8] sm:$0xff]
        %v401 = vld [vmem:[%s3 + $0x10] sm:$0x3]
        %v402 = vld [vmem:[%s5] sm:$0xff]
        %v403 = vld [vmem:[%s5 + $0x8] sm:$0xff]
        %v404 = vld [vmem:[%s5 + $0x10] sm:$0x3]
        %406 = vset.pattern.permute.xlu0 0
        %407 = vperm.xlu0 %406, %v402
        %v408 = vpop.permute.xlu0 %407
        %411 = vset.pattern.permute.xlu0 0
        %412 = vperm.xlu0 %411, %v403
        %v413 = vpop.permute.xlu0 %412
        %416 = vset.pattern.permute.xlu0 0
        %417 = vperm.xlu0 %416, %v404
        %v418 = vpop.permute.xlu0 %417
        %vm420 = vcmask 130048
        %v422 = vsel %vm420, %v399, 0
        %v425 = vsel %vm420, %v400, 0
        %v428 = vsel %vm420, %v401, 0
        %430 = vmatprep.subr.mxu0 0.0
        %431 = vmatpush1.msra.mxu0 0.0
        %432 = vmatprep.subr.mxu0 0.0
        %433 = vmatpush1.msra.mxu0 0.0
        %434 = vmatprep.subr.mxu0 0.0
        %435 = vmatpush1.msra.mxu0 0.0
        %436 = vmatprep.subr.mxu0 0.0
        %437 = vmatpush1.msra.mxu0 0.0
        %438 = vmatprep.subr.mxu0 0.0
        %439 = vmatpush1.msra.mxu0 0.0
        %440 = vmatprep.subr.mxu0 0.0
        %441 = vmatpush1.msra.mxu0 0.0
        %442 = vmatprep.subr.mxu0 0.0
        %443 = vmatpush1.msra.mxu0 0.0
        %444 = vmatprep.subr.mxu0 0.0
        %445 = vmatpush1.msra.mxu0 0.0
        %446 = vmatprep.subr.mxu0 0.0
        %447 = vmatpush1.msra.mxu0 0.0
        %448 = vmatprep.subr.mxu0 0.0
        %449 = vmatpush1.msra.mxu0 0.0
        %450 = vmatprep.subr.mxu0 0.0
        %451 = vmatpush1.msra.mxu0 0.0
        %452 = vmatprep.subr.mxu0 0.0
        %453 = vmatpush1.msra.mxu0 0.0
        %454 = vmatprep.subr.mxu0 0.0
        %455 = vmatpush1.msra.mxu0 0.0
        %456 = vmatprep.subr.mxu0 0.0
        %457 = vmatpush1.msra.mxu0 0.0
        %v458 = vand.u32 %v398, 4294901760
        %459 = vmatprep.subr.mxu0 %v458
        %v460 = vand.u32 %v397, 4294901760
        %461 = vmatpush1.msra.mxu0 %v460
        %v462 = vand.u32 %v396, 4294901760
        %463 = vmatprep.subr.mxu0 %v462
        %v464 = vand.u32 %v395, 4294901760
        %465 = vmatpush1.msra.mxu0 %v464
        %466 = vmatprep.subr.mxu0 0.0
        %467 = vmatpush2.msra.mxu0 0.0
        %468 = vmatprep.subr.mxu0 0.0
        %469 = vmatpush2.msra.mxu0 0.0
        %470 = vmatprep.subr.mxu0 0.0
        %471 = vmatpush2.msra.mxu0 0.0
        %472 = vmatprep.subr.mxu0 0.0
        %473 = vmatpush2.msra.mxu0 0.0
        %474 = vmatprep.subr.mxu0 0.0
        %475 = vmatpush2.msra.mxu0 0.0
        %476 = vmatprep.subr.mxu0 0.0
        %477 = vmatpush2.msra.mxu0 0.0
        %478 = vmatprep.subr.mxu0 0.0
        %479 = vmatpush2.msra.mxu0 0.0
        %480 = vmatprep.subr.mxu0 0.0
        %481 = vmatpush2.msra.mxu0 0.0
        %482 = vmatprep.subr.mxu0 0.0
        %483 = vmatpush2.msra.mxu0 0.0
        %484 = vmatprep.subr.mxu0 0.0
        %485 = vmatpush2.msra.mxu0 0.0
        %486 = vmatprep.subr.mxu0 0.0
        %487 = vmatpush2.msra.mxu0 0.0
        %488 = vmatprep.subr.mxu0 0.0
        %489 = vmatpush2.msra.mxu0 0.0
        %490 = vmatprep.subr.mxu0 0.0
        %491 = vmatpush2.msra.mxu0 0.0
        %492 = vmatprep.subr.mxu0 0.0
        %493 = vmatpush2.msra.mxu0 0.0
        %494 = vmatprep.subr.mxu0 0.0
        %495 = vmatpush2.msra.mxu0 0.0
        %496 = vmatprep.subr.mxu0 0.0
        %497 = vmatpush2.msra.mxu0 0.0
        %498 = vmatprep.mubr.f32.mxu0 0.0
        %v499 = vand.u32 %v422, 4294901760
        %v500 = vsub.f32 %v422, %v499
        %v501 = vand.u32 %v500, 4294901760
        %v502 = vsub.f32 %v500, %v501
        %v503 = vand.u32 %v502, 4294901760
        %504 = vmatmul.mubr.f32.gmra.mxu0 %v503
        %v505 = vpop.f32.mrf.mxu0
        %v506 = vadd.f32 %v408, %v505
        %v507 = vpop.f32.mrf.mxu0
        %v508 = vadd.f32 %v408, %v507
        %509 = vmatprep.mubr.f32.mxu0 0.0
        %v510 = vand.u32 %v425, 4294901760
        %v511 = vsub.f32 %v425, %v510
        %v512 = vand.u32 %v511, 4294901760
        %v513 = vsub.f32 %v511, %v512
        %v514 = vand.u32 %v513, 4294901760
        %515 = vmatmul.mubr.f32.gmra.mxu0 %v514
        %v516 = vpop.f32.mrf.mxu0
        %v517 = vadd.f32 %v413, %v516
        %v518 = vpop.f32.mrf.mxu0
        %v519 = vadd.f32 %v413, %v518
        %520 = vmatprep.mubr.f32.mxu0 0.0
        %v521 = vand.u32 %v428, 4294901760
        %v522 = vsub.f32 %v428, %v521
        %v523 = vand.u32 %v522, 4294901760
        %v524 = vsub.f32 %v522, %v523
        %v525 = vand.u32 %v524, 4294901760
        %526 = vmatmul.mubr.f32.gmra.mxu0 %v525
        %v527 = vpop.f32.mrf.mxu0
        %v528 = vadd.f32 %v418, %v527
        %v529 = vpop.f32.mrf.mxu0
        %v530 = vadd.f32 %v418, %v529
        %531 = vdwg.mxu0
        %532 = vmatprep.subr.mxu0 0.0
        %533 = vmatpush1.msra.mxu0 0.0
        %534 = vmatprep.subr.mxu0 0.0
        %535 = vmatpush1.msra.mxu0 0.0
        %536 = vmatprep.subr.mxu0 0.0
        %537 = vmatpush1.msra.mxu0 0.0
        %538 = vmatprep.subr.mxu0 0.0
        %539 = vmatpush1.msra.mxu0 0.0
        %540 = vmatprep.subr.mxu0 0.0
        %541 = vmatpush1.msra.mxu0 0.0
        %542 = vmatprep.subr.mxu0 0.0
        %543 = vmatpush1.msra.mxu0 0.0
        %544 = vmatprep.subr.mxu0 0.0
        %545 = vmatpush1.msra.mxu0 0.0
        %546 = vmatprep.subr.mxu0 0.0
        %547 = vmatpush1.msra.mxu0 0.0
        %548 = vmatprep.subr.mxu0 0.0
        %549 = vmatpush1.msra.mxu0 0.0
        %550 = vmatprep.subr.mxu0 0.0
        %551 = vmatpush1.msra.mxu0 0.0
        %552 = vmatprep.subr.mxu0 0.0
        %553 = vmatpush1.msra.mxu0 0.0
        %554 = vmatprep.subr.mxu0 0.0
        %555 = vmatpush1.msra.mxu0 0.0
        %556 = vmatprep.subr.mxu0 0.0
        %557 = vmatpush1.msra.mxu0 0.0
        %558 = vmatprep.subr.mxu0 0.0
        %559 = vmatpush1.msra.mxu0 0.0
        %v560 = vand.u32 %v398, 4294901760
        %v561 = vsub.f32 %v398, %v560
        %v562 = vand.u32 %v561, 4294901760
        %v563 = vsub.f32 %v561, %v562
        %v564 = vand.u32 %v563, 4294901760
        %565 = vmatprep.subr.mxu0 %v564
        %v566 = vand.u32 %v397, 4294901760
        %v567 = vsub.f32 %v397, %v566
        %v568 = vand.u32 %v567, 4294901760
        %v569 = vsub.f32 %v567, %v568
        %v570 = vand.u32 %v569, 4294901760
        %571 = vmatpush1.msra.mxu0 %v570
        %v572 = vand.u32 %v396, 4294901760
        %v573 = vsub.f32 %v396, %v572
        %v574 = vand.u32 %v573, 4294901760
        %v575 = vsub.f32 %v573, %v574
        %v576 = vand.u32 %v575, 4294901760
        %577 = vmatprep.subr.mxu0 %v576
        %v578 = vand.u32 %v395, 4294901760
        %v579 = vsub.f32 %v395, %v578
        %v580 = vand.u32 %v579, 4294901760
        %v581 = vsub.f32 %v579, %v580
        %v582 = vand.u32 %v581, 4294901760
        %583 = vmatpush1.msra.mxu0 %v582
        %584 = vmatprep.subr.mxu0 0.0
        %585 = vmatpush2.msra.mxu0 0.0
        %586 = vmatprep.subr.mxu0 0.0
        %587 = vmatpush2.msra.mxu0 0.0
        %588 = vmatprep.subr.mxu0 0.0
        %589 = vmatpush2.msra.mxu0 0.0
        %590 = vmatprep.subr.mxu0 0.0
        %591 = vmatpush2.msra.mxu0 0.0
        %592 = vmatprep.subr.mxu0 0.0
        %593 = vmatpush2.msra.mxu0 0.0
        %594 = vmatprep.subr.mxu0 0.0
        %595 = vmatpush2.msra.mxu0 0.0
        %596 = vmatprep.subr.mxu0 0.0
        %597 = vmatpush2.msra.mxu0 0.0
        %598 = vmatprep.subr.mxu0 0.0
        %599 = vmatpush2.msra.mxu0 0.0
        %600 = vmatprep.subr.mxu0 0.0
        %601 = vmatpush2.msra.mxu0 0.0
        %602 = vmatprep.subr.mxu0 0.0
        %603 = vmatpush2.msra.mxu0 0.0
        %604 = vmatprep.subr.mxu0 0.0
        %605 = vmatpush2.msra.mxu0 0.0
        %606 = vmatprep.subr.mxu0 0.0
        %607 = vmatpush2.msra.mxu0 0.0
        %608 = vmatprep.subr.mxu0 0.0
        %609 = vmatpush2.msra.mxu0 0.0
        %610 = vmatprep.subr.mxu0 0.0
        %611 = vmatpush2.msra.mxu0 0.0
        %612 = vmatprep.subr.mxu0 0.0
        %613 = vmatpush2.msra.mxu0 0.0
        %614 = vmatprep.subr.mxu0 0.0
        %615 = vmatpush2.msra.mxu0 0.0
        %616 = vmatprep.mubr.f32.mxu0 0.0
        %v617 = vand.u32 %v422, 4294901760
        %618 = vmatmul.mubr.f32.gmra.mxu0 %v617
        %v619 = vpop.f32.mrf.mxu0
        %v620 = vadd.f32 %v506, %v619
        %v621 = vpop.f32.mrf.mxu0
        %v622 = vadd.f32 %v508, %v621
        %623 = vmatprep.mubr.f32.mxu0 0.0
        %v624 = vand.u32 %v425, 4294901760
        %625 = vmatmul.mubr.f32.gmra.mxu0 %v624
        %v626 = vpop.f32.mrf.mxu0
        %v627 = vadd.f32 %v517, %v626
        %v628 = vpop.f32.mrf.mxu0
        %v629 = vadd.f32 %v519, %v628
        %630 = vmatprep.mubr.f32.mxu0 0.0
        %v631 = vand.u32 %v428, 4294901760
        %632 = vmatmul.mubr.f32.gmra.mxu0 %v631
        %v633 = vpop.f32.mrf.mxu0
        %v634 = vadd.f32 %v528, %v633
        %v635 = vpop.f32.mrf.mxu0
        %v636 = vadd.f32 %v530, %v635
        %637 = vdwg.mxu0
        %638 = vmatprep.subr.mxu0 0.0
        %639 = vmatpush1.msra.mxu0 0.0
        %640 = vmatprep.subr.mxu0 0.0
        %641 = vmatpush1.msra.mxu0 0.0
        %642 = vmatprep.subr.mxu0 0.0
        %643 = vmatpush1.msra.mxu0 0.0
        %644 = vmatprep.subr.mxu0 0.0
        %645 = vmatpush1.msra.mxu0 0.0
        %646 = vmatprep.subr.mxu0 0.0
        %647 = vmatpush1.msra.mxu0 0.0
        %648 = vmatprep.subr.mxu0 0.0
        %649 = vmatpush1.msra.mxu0 0.0
        %650 = vmatprep.subr.mxu0 0.0
        %651 = vmatpush1.msra.mxu0 0.0
        %652 = vmatprep.subr.mxu0 0.0
        %653 = vmatpush1.msra.mxu0 0.0
        %654 = vmatprep.subr.mxu0 0.0
        %655 = vmatpush1.msra.mxu0 0.0
        %656 = vmatprep.subr.mxu0 0.0
        %657 = vmatpush1.msra.mxu0 0.0
        %658 = vmatprep.subr.mxu0 0.0
        %659 = vmatpush1.msra.mxu0 0.0
        %660 = vmatprep.subr.mxu0 0.0
        %661 = vmatpush1.msra.mxu0 0.0
        %662 = vmatprep.subr.mxu0 0.0
        %663 = vmatpush1.msra.mxu0 0.0
        %664 = vmatprep.subr.mxu0 0.0
        %665 = vmatpush1.msra.mxu0 0.0
        %v666 = vand.u32 %v398, 4294901760
        %v667 = vsub.f32 %v398, %v666
        %668 = vmatprep.subr.mxu0 %v667
        %v669 = vand.u32 %v397, 4294901760
        %v670 = vsub.f32 %v397, %v669
        %671 = vmatpush1.msra.mxu0 %v670
        %v672 = vand.u32 %v396, 4294901760
        %v673 = vsub.f32 %v396, %v672
        %674 = vmatprep.subr.mxu0 %v673
        %v675 = vand.u32 %v395, 4294901760
        %v676 = vsub.f32 %v395, %v675
        %677 = vmatpush1.msra.mxu0 %v676
        %678 = vmatprep.subr.mxu0 0.0
        %679 = vmatpush2.msra.mxu0 0.0
        %680 = vmatprep.subr.mxu0 0.0
        %681 = vmatpush2.msra.mxu0 0.0
        %682 = vmatprep.subr.mxu0 0.0
        %683 = vmatpush2.msra.mxu0 0.0
        %684 = vmatprep.subr.mxu0 0.0
        %685 = vmatpush2.msra.mxu0 0.0
        %686 = vmatprep.subr.mxu0 0.0
        %687 = vmatpush2.msra.mxu0 0.0
        %688 = vmatprep.subr.mxu0 0.0
        %689 = vmatpush2.msra.mxu0 0.0
        %690 = vmatprep.subr.mxu0 0.0
        %691 = vmatpush2.msra.mxu0 0.0
        %692 = vmatprep.subr.mxu0 0.0
        %693 = vmatpush2.msra.mxu0 0.0
        %694 = vmatprep.subr.mxu0 0.0
        %695 = vmatpush2.msra.mxu0 0.0
        %696 = vmatprep.subr.mxu0 0.0
        %697 = vmatpush2.msra.mxu0 0.0
        %698 = vmatprep.subr.mxu0 0.0
        %699 = vmatpush2.msra.mxu0 0.0
        %700 = vmatprep.subr.mxu0 0.0
        %701 = vmatpush2.msra.mxu0 0.0
        %702 = vmatprep.subr.mxu0 0.0
        %703 = vmatpush2.msra.mxu0 0.0
        %704 = vmatprep.subr.mxu0 0.0
        %705 = vmatpush2.msra.mxu0 0.0
        %706 = vmatprep.subr.mxu0 0.0
        %707 = vmatpush2.msra.mxu0 0.0
        %708 = vmatprep.subr.mxu0 0.0
        %709 = vmatpush2.msra.mxu0 0.0
        %710 = vmatprep.mubr.f32.mxu0 0.0
        %v711 = vand.u32 %v422, 4294901760
        %v712 = vsub.f32 %v422, %v711
        %713 = vmatmul.mubr.f32.gmra.mxu0 %v712
        %v714 = vpop.f32.mrf.mxu0
        %v715 = vadd.f32 %v620, %v714
        %v716 = vpop.f32.mrf.mxu0
        %v717 = vadd.f32 %v622, %v716
        %718 = vmatprep.mubr.f32.mxu0 0.0
        %v719 = vand.u32 %v425, 4294901760
        %v720 = vsub.f32 %v425, %v719
        %721 = vmatmul.mubr.f32.gmra.mxu0 %v720
        %v722 = vpop.f32.mrf.mxu0
        %v723 = vadd.f32 %v627, %v722
        %v724 = vpop.f32.mrf.mxu0
        %v725 = vadd.f32 %v629, %v724
        %726 = vmatprep.mubr.f32.mxu0 0.0
        %v727 = vand.u32 %v428, 4294901760
        %v728 = vsub.f32 %v428, %v727
        %729 = vmatmul.mubr.f32.gmra.mxu0 %v728
        %v730 = vpop.f32.mrf.mxu0
        %v731 = vadd.f32 %v634, %v730
        %v732 = vpop.f32.mrf.mxu0
        %v733 = vadd.f32 %v636, %v732
        %734 = vdwg.mxu0
        %735 = vmatprep.subr.mxu0 0.0
        %736 = vmatpush1.msra.mxu0 0.0
        %737 = vmatprep.subr.mxu0 0.0
        %738 = vmatpush1.msra.mxu0 0.0
        %739 = vmatprep.subr.mxu0 0.0
        %740 = vmatpush1.msra.mxu0 0.0
        %741 = vmatprep.subr.mxu0 0.0
        %742 = vmatpush1.msra.mxu0 0.0
        %743 = vmatprep.subr.mxu0 0.0
        %744 = vmatpush1.msra.mxu0 0.0
        %745 = vmatprep.subr.mxu0 0.0
        %746 = vmatpush1.msra.mxu0 0.0
        %747 = vmatprep.subr.mxu0 0.0
        %748 = vmatpush1.msra.mxu0 0.0
        %749 = vmatprep.subr.mxu0 0.0
        %750 = vmatpush1.msra.mxu0 0.0
        %751 = vmatprep.subr.mxu0 0.0
        %752 = vmatpush1.msra.mxu0 0.0
        %753 = vmatprep.subr.mxu0 0.0
        %754 = vmatpush1.msra.mxu0 0.0
        %755 = vmatprep.subr.mxu0 0.0
        %756 = vmatpush1.msra.mxu0 0.0
        %757 = vmatprep.subr.mxu0 0.0
        %758 = vmatpush1.msra.mxu0 0.0
        %759 = vmatprep.subr.mxu0 0.0
        %760 = vmatpush1.msra.mxu0 0.0
        %761 = vmatprep.subr.mxu0 0.0
        %762 = vmatpush1.msra.mxu0 0.0
        %v763 = vand.u32 %v398, 4294901760
        %764 = vmatprep.subr.mxu0 %v763
        %v765 = vand.u32 %v397, 4294901760
        %766 = vmatpush1.msra.mxu0 %v765
        %v767 = vand.u32 %v396, 4294901760
        %768 = vmatprep.subr.mxu0 %v767
        %v769 = vand.u32 %v395, 4294901760
        %770 = vmatpush1.msra.mxu0 %v769
        %771 = vmatprep.subr.mxu0 0.0
        %772 = vmatpush2.msra.mxu0 0.0
        %773 = vmatprep.subr.mxu0 0.0
        %774 = vmatpush2.msra.mxu0 0.0
        %775 = vmatprep.subr.mxu0 0.0
        %776 = vmatpush2.msra.mxu0 0.0
        %777 = vmatprep.subr.mxu0 0.0
        %778 = vmatpush2.msra.mxu0 0.0
        %779 = vmatprep.subr.mxu0 0.0
        %780 = vmatpush2.msra.mxu0 0.0
        %781 = vmatprep.subr.mxu0 0.0
        %782 = vmatpush2.msra.mxu0 0.0
        %783 = vmatprep.subr.mxu0 0.0
        %784 = vmatpush2.msra.mxu0 0.0
        %785 = vmatprep.subr.mxu0 0.0
        %786 = vmatpush2.msra.mxu0 0.0
        %787 = vmatprep.subr.mxu0 0.0
        %788 = vmatpush2.msra.mxu0 0.0
        %789 = vmatprep.subr.mxu0 0.0
        %790 = vmatpush2.msra.mxu0 0.0
        %791 = vmatprep.subr.mxu0 0.0
        %792 = vmatpush2.msra.mxu0 0.0
        %793 = vmatprep.subr.mxu0 0.0
        %794 = vmatpush2.msra.mxu0 0.0
        %795 = vmatprep.subr.mxu0 0.0
        %796 = vmatpush2.msra.mxu0 0.0
        %797 = vmatprep.subr.mxu0 0.0
        %798 = vmatpush2.msra.mxu0 0.0
        %799 = vmatprep.subr.mxu0 0.0
        %800 = vmatpush2.msra.mxu0 0.0
        %801 = vmatprep.subr.mxu0 0.0
        %802 = vmatpush2.msra.mxu0 0.0
        %803 = vmatprep.mubr.f32.mxu0 0.0
        %v804 = vand.u32 %v422, 4294901760
        %v805 = vsub.f32 %v422, %v804
        %v806 = vand.u32 %v805, 4294901760
        %807 = vmatmul.mubr.f32.gmra.mxu0 %v806
        %v808 = vpop.f32.mrf.mxu0
        %v809 = vadd.f32 %v715, %v808
        %v810 = vpop.f32.mrf.mxu0
        %v811 = vadd.f32 %v717, %v810
        %812 = vmatprep.mubr.f32.mxu0 0.0
        %v813 = vand.u32 %v425, 4294901760
        %v814 = vsub.f32 %v425, %v813
        %v815 = vand.u32 %v814, 4294901760
        %816 = vmatmul.mubr.f32.gmra.mxu0 %v815
        %v817 = vpop.f32.mrf.mxu0
        %v818 = vadd.f32 %v723, %v817
        %v819 = vpop.f32.mrf.mxu0
        %v820 = vadd.f32 %v725, %v819
        %821 = vmatprep.mubr.f32.mxu0 0.0
        %v822 = vand.u32 %v428, 4294901760
        %v823 = vsub.f32 %v428, %v822
        %v824 = vand.u32 %v823, 4294901760
        %825 = vmatmul.mubr.f32.gmra.mxu0 %v824
        %v826 = vpop.f32.mrf.mxu0
        %v827 = vadd.f32 %v731, %v826
        %v828 = vpop.f32.mrf.mxu0
        %v829 = vadd.f32 %v733, %v828
        %830 = vdwg.mxu0
        %831 = vmatprep.subr.mxu0 0.0
        %832 = vmatpush1.msra.mxu0 0.0
        %833 = vmatprep.subr.mxu0 0.0
        %834 = vmatpush1.msra.mxu0 0.0
        %835 = vmatprep.subr.mxu0 0.0
        %836 = vmatpush1.msra.mxu0 0.0
        %837 = vmatprep.subr.mxu0 0.0
        %838 = vmatpush1.msra.mxu0 0.0
        %839 = vmatprep.subr.mxu0 0.0
        %840 = vmatpush1.msra.mxu0 0.0
        %841 = vmatprep.subr.mxu0 0.0
        %842 = vmatpush1.msra.mxu0 0.0
        %843 = vmatprep.subr.mxu0 0.0
        %844 = vmatpush1.msra.mxu0 0.0
        %845 = vmatprep.subr.mxu0 0.0
        %846 = vmatpush1.msra.mxu0 0.0
        %847 = vmatprep.subr.mxu0 0.0
        %848 = vmatpush1.msra.mxu0 0.0
        %849 = vmatprep.subr.mxu0 0.0
        %850 = vmatpush1.msra.mxu0 0.0
        %851 = vmatprep.subr.mxu0 0.0
        %852 = vmatpush1.msra.mxu0 0.0
        %853 = vmatprep.subr.mxu0 0.0
        %854 = vmatpush1.msra.mxu0 0.0
        %855 = vmatprep.subr.mxu0 0.0
        %856 = vmatpush1.msra.mxu0 0.0
        %857 = vmatprep.subr.mxu0 0.0
        %858 = vmatpush1.msra.mxu0 0.0
        %v859 = vand.u32 %v398, 4294901760
        %v860 = vsub.f32 %v398, %v859
        %v861 = vand.u32 %v860, 4294901760
        %862 = vmatprep.subr.mxu0 %v861
        %v863 = vand.u32 %v397, 4294901760
        %v864 = vsub.f32 %v397, %v863
        %v865 = vand.u32 %v864, 4294901760
        %866 = vmatpush1.msra.mxu0 %v865
        %v867 = vand.u32 %v396, 4294901760
        %v868 = vsub.f32 %v396, %v867
        %v869 = vand.u32 %v868, 4294901760
        %870 = vmatprep.subr.mxu0 %v869
        %v871 = vand.u32 %v395, 4294901760
        %v872 = vsub.f32 %v395, %v871
        %v873 = vand.u32 %v872, 4294901760
        %874 = vmatpush1.msra.mxu0 %v873
        %875 = vmatprep.subr.mxu0 0.0
        %876 = vmatpush2.msra.mxu0 0.0
        %877 = vmatprep.subr.mxu0 0.0
        %878 = vmatpush2.msra.mxu0 0.0
        %879 = vmatprep.subr.mxu0 0.0
        %880 = vmatpush2.msra.mxu0 0.0
        %881 = vmatprep.subr.mxu0 0.0
        %882 = vmatpush2.msra.mxu0 0.0
        %883 = vmatprep.subr.mxu0 0.0
        %884 = vmatpush2.msra.mxu0 0.0
        %885 = vmatprep.subr.mxu0 0.0
        %886 = vmatpush2.msra.mxu0 0.0
        %887 = vmatprep.subr.mxu0 0.0
        %888 = vmatpush2.msra.mxu0 0.0
        %889 = vmatprep.subr.mxu0 0.0
        %890 = vmatpush2.msra.mxu0 0.0
        %891 = vmatprep.subr.mxu0 0.0
        %892 = vmatpush2.msra.mxu0 0.0
        %893 = vmatprep.subr.mxu0 0.0
        %894 = vmatpush2.msra.mxu0 0.0
        %895 = vmatprep.subr.mxu0 0.0
        %896 = vmatpush2.msra.mxu0 0.0
        %897 = vmatprep.subr.mxu0 0.0
        %898 = vmatpush2.msra.mxu0 0.0
        %899 = vmatprep.subr.mxu0 0.0
        %900 = vmatpush2.msra.mxu0 0.0
        %901 = vmatprep.subr.mxu0 0.0
        %902 = vmatpush2.msra.mxu0 0.0
        %903 = vmatprep.subr.mxu0 0.0
        %904 = vmatpush2.msra.mxu0 0.0
        %905 = vmatprep.subr.mxu0 0.0
        %906 = vmatpush2.msra.mxu0 0.0
        %907 = vmatprep.mubr.f32.mxu0 0.0
        %v908 = vand.u32 %v422, 4294901760
        %909 = vmatmul.mubr.f32.gmra.mxu0 %v908
        %v910 = vpop.f32.mrf.mxu0
        %v911 = vadd.f32 %v809, %v910
        %v912 = vpop.f32.mrf.mxu0
        %v913 = vadd.f32 %v811, %v912
        %914 = vmatprep.mubr.f32.mxu0 0.0
        %v915 = vand.u32 %v425, 4294901760
        %916 = vmatmul.mubr.f32.gmra.mxu0 %v915
        %v917 = vpop.f32.mrf.mxu0
        %v918 = vadd.f32 %v818, %v917
        %v919 = vpop.f32.mrf.mxu0
        %v920 = vadd.f32 %v820, %v919
        %921 = vmatprep.mubr.f32.mxu0 0.0
        %v922 = vand.u32 %v428, 4294901760
        %923 = vmatmul.mubr.f32.gmra.mxu0 %v922
        %v924 = vpop.f32.mrf.mxu0
        %v925 = vadd.f32 %v827, %v924
        %v926 = vpop.f32.mrf.mxu0
        %v927 = vadd.f32 %v829, %v926
        %928 = vdwg.mxu0
        %929 = vmatprep.subr.mxu0 0.0
        %930 = vmatpush1.msra.mxu0 0.0
        %931 = vmatprep.subr.mxu0 0.0
        %932 = vmatpush1.msra.mxu0 0.0
        %933 = vmatprep.subr.mxu0 0.0
        %934 = vmatpush1.msra.mxu0 0.0
        %935 = vmatprep.subr.mxu0 0.0
        %936 = vmatpush1.msra.mxu0 0.0
        %937 = vmatprep.subr.mxu0 0.0
        %938 = vmatpush1.msra.mxu0 0.0
        %939 = vmatprep.subr.mxu0 0.0
        %940 = vmatpush1.msra.mxu0 0.0
        %941 = vmatprep.subr.mxu0 0.0
        %942 = vmatpush1.msra.mxu0 0.0
        %943 = vmatprep.subr.mxu0 0.0
        %944 = vmatpush1.msra.mxu0 0.0
        %945 = vmatprep.subr.mxu0 0.0
        %946 = vmatpush1.msra.mxu0 0.0
        %947 = vmatprep.subr.mxu0 0.0
        %948 = vmatpush1.msra.mxu0 0.0
        %949 = vmatprep.subr.mxu0 0.0
        %950 = vmatpush1.msra.mxu0 0.0
        %951 = vmatprep.subr.mxu0 0.0
        %952 = vmatpush1.msra.mxu0 0.0
        %953 = vmatprep.subr.mxu0 0.0
        %954 = vmatpush1.msra.mxu0 0.0
        %955 = vmatprep.subr.mxu0 0.0
        %956 = vmatpush1.msra.mxu0 0.0
        %v957 = vand.u32 %v398, 4294901760
        %958 = vmatprep.subr.mxu0 %v957
        %v959 = vand.u32 %v397, 4294901760
        %960 = vmatpush1.msra.mxu0 %v959
        %v961 = vand.u32 %v396, 4294901760
        %962 = vmatprep.subr.mxu0 %v961
        %v963 = vand.u32 %v395, 4294901760
        %964 = vmatpush1.msra.mxu0 %v963
        %965 = vmatprep.subr.mxu0 0.0
        %966 = vmatpush2.msra.mxu0 0.0
        %967 = vmatprep.subr.mxu0 0.0
        %968 = vmatpush2.msra.mxu0 0.0
        %969 = vmatprep.subr.mxu0 0.0
        %970 = vmatpush2.msra.mxu0 0.0
        %971 = vmatprep.subr.mxu0 0.0
        %972 = vmatpush2.msra.mxu0 0.0
        %973 = vmatprep.subr.mxu0 0.0
        %974 = vmatpush2.msra.mxu0 0.0
        %975 = vmatprep.subr.mxu0 0.0
        %976 = vmatpush2.msra.mxu0 0.0
        %977 = vmatprep.subr.mxu0 0.0
        %978 = vmatpush2.msra.mxu0 0.0
        %979 = vmatprep.subr.mxu0 0.0
        %980 = vmatpush2.msra.mxu0 0.0
        %981 = vmatprep.subr.mxu0 0.0
        %982 = vmatpush2.msra.mxu0 0.0
        %983 = vmatprep.subr.mxu0 0.0
        %984 = vmatpush2.msra.mxu0 0.0
        %985 = vmatprep.subr.mxu0 0.0
        %986 = vmatpush2.msra.mxu0 0.0
        %987 = vmatprep.subr.mxu0 0.0
        %988 = vmatpush2.msra.mxu0 0.0
        %989 = vmatprep.subr.mxu0 0.0
        %990 = vmatpush2.msra.mxu0 0.0
        %991 = vmatprep.subr.mxu0 0.0
        %992 = vmatpush2.msra.mxu0 0.0
        %993 = vmatprep.subr.mxu0 0.0
        %994 = vmatpush2.msra.mxu0 0.0
        %995 = vmatprep.subr.mxu0 0.0
        %996 = vmatpush2.msra.mxu0 0.0
        %997 = vmatprep.mubr.f32.mxu0 0.0
        %v998 = vand.u32 %v422, 4294901760
        %999 = vmatmul.mubr.f32.gmra.mxu0 %v998
        %v1000 = vpop.f32.mrf.mxu0
        %v1001 = vadd.f32 %v911, %v1000
        %v1002 = vpop.f32.mrf.mxu0
        %v1003 = vadd.f32 %v913, %v1002
        %1004 = vmatprep.mubr.f32.mxu0 0.0
        %v1005 = vand.u32 %v425, 4294901760
        %1006 = vmatmul.mubr.f32.gmra.mxu0 %v1005
        %v1007 = vpop.f32.mrf.mxu0
        %v1008 = vadd.f32 %v918, %v1007
        %v1009 = vpop.f32.mrf.mxu0
        %v1010 = vadd.f32 %v920, %v1009
        %1011 = vmatprep.mubr.f32.mxu0 0.0
        %v1012 = vand.u32 %v428, 4294901760
        %1013 = vmatmul.mubr.f32.gmra.mxu0 %v1012
        %v1014 = vpop.f32.mrf.mxu0
        %v1015 = vadd.f32 %v925, %v1014
        %v1016 = vpop.f32.mrf.mxu0
        %v1017 = vadd.f32 %v927, %v1016
        %1018 = vdwg.mxu0
        %v1019 = vmax.f32 %v1001, 0.0
        %v1020 = vmax.f32 %v1003, 0.0
        %v1021 = vmax.f32 %v1008, 0.0
        %v1022 = vmax.f32 %v1010, 0.0
        %v1023 = vmax.f32 %v1015, 0.0
        %v1024 = vmax.f32 %v1017, 0.0
        %v1025 = vld [vmem:[%s327] sm:$0xff]
        %v1026 = vld [vmem:[%s327 + $0x8] sm:$0xff]
        %v1027 = vld [vmem:[%s327 + $0x10] sm:$0xff]
        %v1028 = vld [vmem:[%s327 + $0x18] sm:$0xff]
        %v1029 = vld [vmem:[%s327 + $0x20] sm:$0x3]
        %v1030 = vld [vmem:[%s327 + $0x28] sm:$0x3]
        %v1031 = vadd.f32 %v1019, %v1025
        %v1032 = vadd.f32 %v1020, %v1026
        %v1033 = vadd.f32 %v1021, %v1027
        %v1034 = vadd.f32 %v1022, %v1028
        %v1035 = vadd.f32 %v1023, %v1029
        %v1036 = vadd.f32 %v1024, %v1030
        %v1037 = vld [vmem:[%s4] sm:$0xff]
        %v1038 = vld [vmem:[%s4 + $0x8] sm:$0xff]
        %v1039 = vld [vmem:[%s4 + $0x10] sm:$0x3]
        %v1040 = vld [vmem:[%s6] sm:$0xff]
        %v1041 = vld [vmem:[%s6 + $0x8] sm:$0xff]
        %v1042 = vld [vmem:[%s6 + $0x10] sm:$0x3]
        %1044 = vset.pattern.permute.xlu0 0
        %1045 = vperm.xlu0 %1044, %v1040
        %v1046 = vpop.permute.xlu0 %1045
        %1049 = vset.pattern.permute.xlu0 0
        %1050 = vperm.xlu0 %1049, %v1041
        %v1051 = vpop.permute.xlu0 %1050
        %1054 = vset.pattern.permute.xlu0 0
        %1055 = vperm.xlu0 %1054, %v1042
        %v1056 = vpop.permute.xlu0 %1055
        %vm1058 = vcmask 146432
        %v1060 = vsel %vm1058, %v1037, 0
        %v1063 = vsel %vm1058, %v1038, 0
        %v1066 = vsel %vm1058, %v1039, 0
        %vm1068 = vcmask 1041408
        %v1070 = vsel %vm1068, %v1035, 0
        %v1073 = vsel %vm1068, %v1036, 0
        %1075 = vmatprep.subr.mxu0 0.0
        %1076 = vmatpush1.msra.mxu0 0.0
        %1077 = vmatprep.subr.mxu0 0.0
        %1078 = vmatpush1.msra.mxu0 0.0
        %1079 = vmatprep.subr.mxu0 0.0
        %1080 = vmatpush1.msra.mxu0 0.0
        %1081 = vmatprep.subr.mxu0 0.0
        %1082 = vmatpush1.msra.mxu0 0.0
        %1083 = vmatprep.subr.mxu0 0.0
        %1084 = vmatpush1.msra.mxu0 0.0
        %1085 = vmatprep.subr.mxu0 0.0
        %1086 = vmatpush1.msra.mxu0 0.0
        %1087 = vmatprep.subr.mxu0 0.0
        %1088 = vmatpush1.msra.mxu0 0.0
        %1089 = vmatprep.subr.mxu0 0.0
        %1090 = vmatpush1.msra.mxu0 0.0
        %1091 = vmatprep.subr.mxu0 0.0
        %1092 = vmatpush1.msra.mxu0 0.0
        %1093 = vmatprep.subr.mxu0 0.0
        %1094 = vmatpush1.msra.mxu0 0.0
        %1095 = vmatprep.subr.mxu0 0.0
        %1096 = vmatpush1.msra.mxu0 0.0
        %1097 = vmatprep.subr.mxu0 0.0
        %1098 = vmatpush1.msra.mxu0 0.0
        %1099 = vmatprep.subr.mxu0 0.0
        %1100 = vmatpush1.msra.mxu0 0.0
        %v1101 = vand.u32 %v1073, 4294901760
        %1102 = vmatprep.subr.mxu0 %v1101
        %v1103 = vand.u32 %v1070, 4294901760
        %1104 = vmatpush1.msra.mxu0 %v1103
        %v1105 = vand.u32 %v1034, 4294901760
        %1106 = vmatprep.subr.mxu0 %v1105
        %v1107 = vand.u32 %v1033, 4294901760
        %1108 = vmatpush1.msra.mxu0 %v1107
        %v1109 = vand.u32 %v1032, 4294901760
        %1110 = vmatprep.subr.mxu0 %v1109
        %v1111 = vand.u32 %v1031, 4294901760
        %1112 = vmatpush1.msra.mxu0 %v1111
        %1113 = vmatprep.subr.mxu0 0.0
        %1114 = vmatpush2.msra.mxu0 0.0
        %1115 = vmatprep.subr.mxu0 0.0
        %1116 = vmatpush2.msra.mxu0 0.0
        %1117 = vmatprep.subr.mxu0 0.0
        %1118 = vmatpush2.msra.mxu0 0.0
        %1119 = vmatprep.subr.mxu0 0.0
        %1120 = vmatpush2.msra.mxu0 0.0
        %1121 = vmatprep.subr.mxu0 0.0
        %1122 = vmatpush2.msra.mxu0 0.0
        %1123 = vmatprep.subr.mxu0 0.0
        %1124 = vmatpush2.msra.mxu0 0.0
        %1125 = vmatprep.subr.mxu0 0.0
        %1126 = vmatpush2.msra.mxu0 0.0
        %1127 = vmatprep.subr.mxu0 0.0
        %1128 = vmatpush2.msra.mxu0 0.0
        %1129 = vmatprep.subr.mxu0 0.0
        %1130 = vmatpush2.msra.mxu0 0.0
        %1131 = vmatprep.subr.mxu0 0.0
        %1132 = vmatpush2.msra.mxu0 0.0
        %1133 = vmatprep.subr.mxu0 0.0
        %1134 = vmatpush2.msra.mxu0 0.0
        %1135 = vmatprep.subr.mxu0 0.0
        %1136 = vmatpush2.msra.mxu0 0.0
        %1137 = vmatprep.subr.mxu0 0.0
        %1138 = vmatpush2.msra.mxu0 0.0
        %1139 = vmatprep.subr.mxu0 0.0
        %1140 = vmatpush2.msra.mxu0 0.0
        %1141 = vmatprep.subr.mxu0 0.0
        %1142 = vmatpush2.msra.mxu0 0.0
        %1143 = vmatprep.subr.mxu0 0.0
        %1144 = vmatpush2.msra.mxu0 0.0
        %1145 = vmatprep.mubr.f32.mxu0 0.0
        %v1146 = vand.u32 %v1060, 4294901760
        %v1147 = vsub.f32 %v1060, %v1146
        %v1148 = vand.u32 %v1147, 4294901760
        %v1149 = vsub.f32 %v1147, %v1148
        %v1150 = vand.u32 %v1149, 4294901760
        %1151 = vmatmul.mubr.f32.gmra.mxu0 %v1150
        %v1152 = vpop.f32.mrf.mxu0
        %v1153 = vadd.f32 %v1046, %v1152
        %v1154 = vpop.f32.mrf.mxu0
        %v1155 = vadd.f32 %v1046, %v1154
        %1156 = vmatprep.mubr.f32.mxu0 0.0
        %v1157 = vand.u32 %v1063, 4294901760
        %v1158 = vsub.f32 %v1063, %v1157
        %v1159 = vand.u32 %v1158, 4294901760
        %v1160 = vsub.f32 %v1158, %v1159
        %v1161 = vand.u32 %v1160, 4294901760
        %1162 = vmatmul.mubr.f32.gmra.mxu0 %v1161
        %v1163 = vpop.f32.mrf.mxu0
        %v1164 = vadd.f32 %v1051, %v1163
        %v1165 = vpop.f32.mrf.mxu0
        %v1166 = vadd.f32 %v1051, %v1165
        %1167 = vmatprep.mubr.f32.mxu0 0.0
        %v1168 = vand.u32 %v1066, 4294901760
        %v1169 = vsub.f32 %v1066, %v1168
        %v1170 = vand.u32 %v1169, 4294901760
        %v1171 = vsub.f32 %v1169, %v1170
        %v1172 = vand.u32 %v1171, 4294901760
        %1173 = vmatmul.mubr.f32.gmra.mxu0 %v1172
        %v1174 = vpop.f32.mrf.mxu0
        %v1175 = vadd.f32 %v1056, %v1174
        %v1176 = vpop.f32.mrf.mxu0
        %v1177 = vadd.f32 %v1056, %v1176
        %1178 = vdwg.mxu0
        %1179 = vmatprep.subr.mxu0 0.0
        %1180 = vmatpush1.msra.mxu0 0.0
        %1181 = vmatprep.subr.mxu0 0.0
        %1182 = vmatpush1.msra.mxu0 0.0
        %1183 = vmatprep.subr.mxu0 0.0
        %1184 = vmatpush1.msra.mxu0 0.0
        %1185 = vmatprep.subr.mxu0 0.0
        %1186 = vmatpush1.msra.mxu0 0.0
        %1187 = vmatprep.subr.mxu0 0.0
        %1188 = vmatpush1.msra.mxu0 0.0
        %1189 = vmatprep.subr.mxu0 0.0
        %1190 = vmatpush1.msra.mxu0 0.0
        %1191 = vmatprep.subr.mxu0 0.0
        %1192 = vmatpush1.msra.mxu0 0.0
        %1193 = vmatprep.subr.mxu0 0.0
        %1194 = vmatpush1.msra.mxu0 0.0
        %1195 = vmatprep.subr.mxu0 0.0
        %1196 = vmatpush1.msra.mxu0 0.0
        %1197 = vmatprep.subr.mxu0 0.0
        %1198 = vmatpush1.msra.mxu0 0.0
        %1199 = vmatprep.subr.mxu0 0.0
        %1200 = vmatpush1.msra.mxu0 0.0
        %1201 = vmatprep.subr.mxu0 0.0
        %1202 = vmatpush1.msra.mxu0 0.0
        %1203 = vmatprep.subr.mxu0 0.0
        %1204 = vmatpush1.msra.mxu0 0.0
        %v1205 = vand.u32 %v1073, 4294901760
        %v1206 = vsub.f32 %v1073, %v1205
        %v1207 = vand.u32 %v1206, 4294901760
        %v1208 = vsub.f32 %v1206, %v1207
        %v1209 = vand.u32 %v1208, 4294901760
        %1210 = vmatprep.subr.mxu0 %v1209
        %v1211 = vand.u32 %v1070, 4294901760
        %v1212 = vsub.f32 %v1070, %v1211
        %v1213 = vand.u32 %v1212, 4294901760
        %v1214 = vsub.f32 %v1212, %v1213
        %v1215 = vand.u32 %v1214, 4294901760
        %1216 = vmatpush1.msra.mxu0 %v1215
        %v1217 = vand.u32 %v1034, 4294901760
        %v1218 = vsub.f32 %v1034, %v1217
        %v1219 = vand.u32 %v1218, 4294901760
        %v1220 = vsub.f32 %v1218, %v1219
        %v1221 = vand.u32 %v1220, 4294901760
        %1222 = vmatprep.subr.mxu0 %v1221
        %v1223 = vand.u32 %v1033, 4294901760
        %v1224 = vsub.f32 %v1033, %v1223
        %v1225 = vand.u32 %v1224, 4294901760
        %v1226 = vsub.f32 %v1224, %v1225
        %v1227 = vand.u32 %v1226, 4294901760
        %1228 = vmatpush1.msra.mxu0 %v1227
        %v1229 = vand.u32 %v1032, 4294901760
        %v1230 = vsub.f32 %v1032, %v1229
        %v1231 = vand.u32 %v1230, 4294901760
        %v1232 = vsub.f32 %v1230, %v1231
        %v1233 = vand.u32 %v1232, 4294901760
        %1234 = vmatprep.subr.mxu0 %v1233
        %v1235 = vand.u32 %v1031, 4294901760
        %v1236 = vsub.f32 %v1031, %v1235
        %v1237 = vand.u32 %v1236, 4294901760
        %v1238 = vsub.f32 %v1236, %v1237
        %v1239 = vand.u32 %v1238, 4294901760
        %1240 = vmatpush1.msra.mxu0 %v1239
        %1241 = vmatprep.subr.mxu0 0.0
        %1242 = vmatpush2.msra.mxu0 0.0
        %1243 = vmatprep.subr.mxu0 0.0
        %1244 = vmatpush2.msra.mxu0 0.0
        %1245 = vmatprep.subr.mxu0 0.0
        %1246 = vmatpush2.msra.mxu0 0.0
        %1247 = vmatprep.subr.mxu0 0.0
        %1248 = vmatpush2.msra.mxu0 0.0
        %1249 = vmatprep.subr.mxu0 0.0
        %1250 = vmatpush2.msra.mxu0 0.0
        %1251 = vmatprep.subr.mxu0 0.0
        %1252 = vmatpush2.msra.mxu0 0.0
        %1253 = vmatprep.subr.mxu0 0.0
        %1254 = vmatpush2.msra.mxu0 0.0
        %1255 = vmatprep.subr.mxu0 0.0
        %1256 = vmatpush2.msra.mxu0 0.0
        %1257 = vmatprep.subr.mxu0 0.0
        %1258 = vmatpush2.msra.mxu0 0.0
        %1259 = vmatprep.subr.mxu0 0.0
        %1260 = vmatpush2.msra.mxu0 0.0
        %1261 = vmatprep.subr.mxu0 0.0
        %1262 = vmatpush2.msra.mxu0 0.0
        %1263 = vmatprep.subr.mxu0 0.0
        %1264 = vmatpush2.msra.mxu0 0.0
        %1265 = vmatprep.subr.mxu0 0.0
        %1266 = vmatpush2.msra.mxu0 0.0
        %1267 = vmatprep.subr.mxu0 0.0
        %1268 = vmatpush2.msra.mxu0 0.0
        %1269 = vmatprep.subr.mxu0 0.0
        %1270 = vmatpush2.msra.mxu0 0.0
        %1271 = vmatprep.subr.mxu0 0.0
        %1272 = vmatpush2.msra.mxu0 0.0
        %1273 = vmatprep.mubr.f32.mxu0 0.0
        %v1274 = vand.u32 %v1060, 4294901760
        %1275 = vmatmul.mubr.f32.gmra.mxu0 %v1274
        %v1276 = vpop.f32.mrf.mxu0
        %v1277 = vadd.f32 %v1153, %v1276
        %v1278 = vpop.f32.mrf.mxu0
        %v1279 = vadd.f32 %v1155, %v1278
        %1280 = vmatprep.mubr.f32.mxu0 0.0
        %v1281 = vand.u32 %v1063, 4294901760
        %1282 = vmatmul.mubr.f32.gmra.mxu0 %v1281
        %v1283 = vpop.f32.mrf.mxu0
        %v1284 = vadd.f32 %v1164, %v1283
        %v1285 = vpop.f32.mrf.mxu0
        %v1286 = vadd.f32 %v1166, %v1285
        %1287 = vmatprep.mubr.f32.mxu0 0.0
        %v1288 = vand.u32 %v1066, 4294901760
        %1289 = vmatmul.mubr.f32.gmra.mxu0 %v1288
        %v1290 = vpop.f32.mrf.mxu0
        %v1291 = vadd.f32 %v1175, %v1290
        %v1292 = vpop.f32.mrf.mxu0
        %v1293 = vadd.f32 %v1177, %v1292
        %1294 = vdwg.mxu0
        %1295 = vmatprep.subr.mxu0 0.0
        %1296 = vmatpush1.msra.mxu0 0.0
        %1297 = vmatprep.subr.mxu0 0.0
        %1298 = vmatpush1.msra.mxu0 0.0
        %1299 = vmatprep.subr.mxu0 0.0
        %1300 = vmatpush1.msra.mxu0 0.0
        %1301 = vmatprep.subr.mxu0 0.0
        %1302 = vmatpush1.msra.mxu0 0.0
        %1303 = vmatprep.subr.mxu0 0.0
        %1304 = vmatpush1.msra.mxu0 0.0
        %1305 = vmatprep.subr.mxu0 0.0
        %1306 = vmatpush1.msra.mxu0 0.0
        %1307 = vmatprep.subr.mxu0 0.0
        %1308 = vmatpush1.msra.mxu0 0.0
        %1309 = vmatprep.subr.mxu0 0.0
        %1310 = vmatpush1.msra.mxu0 0.0
        %1311 = vmatprep.subr.mxu0 0.0
        %1312 = vmatpush1.msra.mxu0 0.0
        %1313 = vmatprep.subr.mxu0 0.0
        %1314 = vmatpush1.msra.mxu0 0.0
        %1315 = vmatprep.subr.mxu0 0.0
        %1316 = vmatpush1.msra.mxu0 0.0
        %1317 = vmatprep.subr.mxu0 0.0
        %1318 = vmatpush1.msra.mxu0 0.0
        %1319 = vmatprep.subr.mxu0 0.0
        %1320 = vmatpush1.msra.mxu0 0.0
        %v1321 = vand.u32 %v1073, 4294901760
        %v1322 = vsub.f32 %v1073, %v1321
        %1323 = vmatprep.subr.mxu0 %v1322
        %v1324 = vand.u32 %v1070, 4294901760
        %v1325 = vsub.f32 %v1070, %v1324
        %1326 = vmatpush1.msra.mxu0 %v1325
        %v1327 = vand.u32 %v1034, 4294901760
        %v1328 = vsub.f32 %v1034, %v1327
        %1329 = vmatprep.subr.mxu0 %v1328
        %v1330 = vand.u32 %v1033, 4294901760
        %v1331 = vsub.f32 %v1033, %v1330
        %1332 = vmatpush1.msra.mxu0 %v1331
        %v1333 = vand.u32 %v1032, 4294901760
        %v1334 = vsub.f32 %v1032, %v1333
        %1335 = vmatprep.subr.mxu0 %v1334
        %v1336 = vand.u32 %v1031, 4294901760
        %v1337 = vsub.f32 %v1031, %v1336
        %1338 = vmatpush1.msra.mxu0 %v1337
        %1339 = vmatprep.subr.mxu0 0.0
        %1340 = vmatpush2.msra.mxu0 0.0
        %1341 = vmatprep.subr.mxu0 0.0
        %1342 = vmatpush2.msra.mxu0 0.0
        %1343 = vmatprep.subr.mxu0 0.0
        %1344 = vmatpush2.msra.mxu0 0.0
        %1345 = vmatprep.subr.mxu0 0.0
        %1346 = vmatpush2.msra.mxu0 0.0
        %1347 = vmatprep.subr.mxu0 0.0
        %1348 = vmatpush2.msra.mxu0 0.0
        %1349 = vmatprep.subr.mxu0 0.0
        %1350 = vmatpush2.msra.mxu0 0.0
        %1351 = vmatprep.subr.mxu0 0.0
        %1352 = vmatpush2.msra.mxu0 0.0
        %1353 = vmatprep.subr.mxu0 0.0
        %1354 = vmatpush2.msra.mxu0 0.0
        %1355 = vmatprep.subr.mxu0 0.0
        %1356 = vmatpush2.msra.mxu0 0.0
        %1357 = vmatprep.subr.mxu0 0.0
        %1358 = vmatpush2.msra.mxu0 0.0
        %1359 = vmatprep.subr.mxu0 0.0
        %1360 = vmatpush2.msra.mxu0 0.0
        %1361 = vmatprep.subr.mxu0 0.0
        %1362 = vmatpush2.msra.mxu0 0.0
        %1363 = vmatprep.subr.mxu0 0.0
        %1364 = vmatpush2.msra.mxu0 0.0
        %1365 = vmatprep.subr.mxu0 0.0
        %1366 = vmatpush2.msra.mxu0 0.0
        %1367 = vmatprep.subr.mxu0 0.0
        %1368 = vmatpush2.msra.mxu0 0.0
        %1369 = vmatprep.subr.mxu0 0.0
        %1370 = vmatpush2.msra.mxu0 0.0
        %1371 = vmatprep.mubr.f32.mxu0 0.0
        %v1372 = vand.u32 %v1060, 4294901760
        %v1373 = vsub.f32 %v1060, %v1372
        %1374 = vmatmul.mubr.f32.gmra.mxu0 %v1373
        %v1375 = vpop.f32.mrf.mxu0
        %v1376 = vadd.f32 %v1277, %v1375
        %v1377 = vpop.f32.mrf.mxu0
        %v1378 = vadd.f32 %v1279, %v1377
        %1379 = vmatprep.mubr.f32.mxu0 0.0
        %v1380 = vand.u32 %v1063, 4294901760
        %v1381 = vsub.f32 %v1063, %v1380
        %1382 = vmatmul.mubr.f32.gmra.mxu0 %v1381
        %v1383 = vpop.f32.mrf.mxu0
        %v1384 = vadd.f32 %v1284, %v1383
        %v1385 = vpop.f32.mrf.mxu0
        %v1386 = vadd.f32 %v1286, %v1385
        %1387 = vmatprep.mubr.f32.mxu0 0.0
        %v1388 = vand.u32 %v1066, 4294901760
        %v1389 = vsub.f32 %v1066, %v1388
        %1390 = vmatmul.mubr.f32.gmra.mxu0 %v1389
        %v1391 = vpop.f32.mrf.mxu0
        %v1392 = vadd.f32 %v1291, %v1391
        %v1393 = vpop.f32.mrf.mxu0
        %v1394 = vadd.f32 %v1293, %v1393
        %1395 = vdwg.mxu0
        %1396 = vmatprep.subr.mxu0 0.0
        %1397 = vmatpush1.msra.mxu0 0.0
        %1398 = vmatprep.subr.mxu0 0.0
        %1399 = vmatpush1.msra.mxu0 0.0
        %1400 = vmatprep.subr.mxu0 0.0
        %1401 = vmatpush1.msra.mxu0 0.0
        %1402 = vmatprep.subr.mxu0 0.0
        %1403 = vmatpush1.msra.mxu0 0.0
        %1404 = vmatprep.subr.mxu0 0.0
        %1405 = vmatpush1.msra.mxu0 0.0
        %1406 = vmatprep.subr.mxu0 0.0
        %1407 = vmatpush1.msra.mxu0 0.0
        %1408 = vmatprep.subr.mxu0 0.0
        %1409 = vmatpush1.msra.mxu0 0.0
        %1410 = vmatprep.subr.mxu0 0.0
        %1411 = vmatpush1.msra.mxu0 0.0
        %1412 = vmatprep.subr.mxu0 0.0
        %1413 = vmatpush1.msra.mxu0 0.0
        %1414 = vmatprep.subr.mxu0 0.0
        %1415 = vmatpush1.msra.mxu0 0.0
        %1416 = vmatprep.subr.mxu0 0.0
        %1417 = vmatpush1.msra.mxu0 0.0
        %1418 = vmatprep.subr.mxu0 0.0
        %1419 = vmatpush1.msra.mxu0 0.0
        %1420 = vmatprep.subr.mxu0 0.0
        %1421 = vmatpush1.msra.mxu0 0.0
        %v1422 = vand.u32 %v1073, 4294901760
        %1423 = vmatprep.subr.mxu0 %v1422
        %v1424 = vand.u32 %v1070, 4294901760
        %1425 = vmatpush1.msra.mxu0 %v1424
        %v1426 = vand.u32 %v1034, 4294901760
        %1427 = vmatprep.subr.mxu0 %v1426
        %v1428 = vand.u32 %v1033, 4294901760
        %1429 = vmatpush1.msra.mxu0 %v1428
        %v1430 = vand.u32 %v1032, 4294901760
        %1431 = vmatprep.subr.mxu0 %v1430
        %v1432 = vand.u32 %v1031, 4294901760
        %1433 = vmatpush1.msra.mxu0 %v1432
        %1434 = vmatprep.subr.mxu0 0.0
        %1435 = vmatpush2.msra.mxu0 0.0
        %1436 = vmatprep.subr.mxu0 0.0
        %1437 = vmatpush2.msra.mxu0 0.0
        %1438 = vmatprep.subr.mxu0 0.0
        %1439 = vmatpush2.msra.mxu0 0.0
        %1440 = vmatprep.subr.mxu0 0.0
        %1441 = vmatpush2.msra.mxu0 0.0
        %1442 = vmatprep.subr.mxu0 0.0
        %1443 = vmatpush2.msra.mxu0 0.0
        %1444 = vmatprep.subr.mxu0 0.0
        %1445 = vmatpush2.msra.mxu0 0.0
        %1446 = vmatprep.subr.mxu0 0.0
        %1447 = vmatpush2.msra.mxu0 0.0
        %1448 = vmatprep.subr.mxu0 0.0
        %1449 = vmatpush2.msra.mxu0 0.0
        %1450 = vmatprep.subr.mxu0 0.0
        %1451 = vmatpush2.msra.mxu0 0.0
        %1452 = vmatprep.subr.mxu0 0.0
        %1453 = vmatpush2.msra.mxu0 0.0
        %1454 = vmatprep.subr.mxu0 0.0
        %1455 = vmatpush2.msra.mxu0 0.0
        %1456 = vmatprep.subr.mxu0 0.0
        %1457 = vmatpush2.msra.mxu0 0.0
        %1458 = vmatprep.subr.mxu0 0.0
        %1459 = vmatpush2.msra.mxu0 0.0
        %1460 = vmatprep.subr.mxu0 0.0
        %1461 = vmatpush2.msra.mxu0 0.0
        %1462 = vmatprep.subr.mxu0 0.0
        %1463 = vmatpush2.msra.mxu0 0.0
        %1464 = vmatprep.subr.mxu0 0.0
        %1465 = vmatpush2.msra.mxu0 0.0
        %1466 = vmatprep.mubr.f32.mxu0 0.0
        %v1467 = vand.u32 %v1060, 4294901760
        %v1468 = vsub.f32 %v1060, %v1467
        %v1469 = vand.u32 %v1468, 4294901760
        %1470 = vmatmul.mubr.f32.gmra.mxu0 %v1469
        %v1471 = vpop.f32.mrf.mxu0
        %v1472 = vadd.f32 %v1376, %v1471
        %v1473 = vpop.f32.mrf.mxu0
        %v1474 = vadd.f32 %v1378, %v1473
        %1475 = vmatprep.mubr.f32.mxu0 0.0
        %v1476 = vand.u32 %v1063, 4294901760
        %v1477 = vsub.f32 %v1063, %v1476
        %v1478 = vand.u32 %v1477, 4294901760
        %1479 = vmatmul.mubr.f32.gmra.mxu0 %v1478
        %v1480 = vpop.f32.mrf.mxu0
        %v1481 = vadd.f32 %v1384, %v1480
        %v1482 = vpop.f32.mrf.mxu0
        %v1483 = vadd.f32 %v1386, %v1482
        %1484 = vmatprep.mubr.f32.mxu0 0.0
        %v1485 = vand.u32 %v1066, 4294901760
        %v1486 = vsub.f32 %v1066, %v1485
        %v1487 = vand.u32 %v1486, 4294901760
        %1488 = vmatmul.mubr.f32.gmra.mxu0 %v1487
        %v1489 = vpop.f32.mrf.mxu0
        %v1490 = vadd.f32 %v1392, %v1489
        %v1491 = vpop.f32.mrf.mxu0
        %v1492 = vadd.f32 %v1394, %v1491
        %1493 = vdwg.mxu0
        %1494 = vmatprep.subr.mxu0 0.0
        %1495 = vmatpush1.msra.mxu0 0.0
        %1496 = vmatprep.subr.mxu0 0.0
        %1497 = vmatpush1.msra.mxu0 0.0
        %1498 = vmatprep.subr.mxu0 0.0
        %1499 = vmatpush1.msra.mxu0 0.0
        %1500 = vmatprep.subr.mxu0 0.0
        %1501 = vmatpush1.msra.mxu0 0.0
        %1502 = vmatprep.subr.mxu0 0.0
        %1503 = vmatpush1.msra.mxu0 0.0
        %1504 = vmatprep.subr.mxu0 0.0
        %1505 = vmatpush1.msra.mxu0 0.0
        %1506 = vmatprep.subr.mxu0 0.0
        %1507 = vmatpush1.msra.mxu0 0.0
        %1508 = vmatprep.subr.mxu0 0.0
        %1509 = vmatpush1.msra.mxu0 0.0
        %1510 = vmatprep.subr.mxu0 0.0
        %1511 = vmatpush1.msra.mxu0 0.0
        %1512 = vmatprep.subr.mxu0 0.0
        %1513 = vmatpush1.msra.mxu0 0.0
        %1514 = vmatprep.subr.mxu0 0.0
        %1515 = vmatpush1.msra.mxu0 0.0
        %1516 = vmatprep.subr.mxu0 0.0
        %1517 = vmatpush1.msra.mxu0 0.0
        %1518 = vmatprep.subr.mxu0 0.0
        %1519 = vmatpush1.msra.mxu0 0.0
        %v1520 = vand.u32 %v1073, 4294901760
        %v1521 = vsub.f32 %v1073, %v1520
        %v1522 = vand.u32 %v1521, 4294901760
        %1523 = vmatprep.subr.mxu0 %v1522
        %v1524 = vand.u32 %v1070, 4294901760
        %v1525 = vsub.f32 %v1070, %v1524
        %v1526 = vand.u32 %v1525, 4294901760
        %1527 = vmatpush1.msra.mxu0 %v1526
        %v1528 = vand.u32 %v1034, 4294901760
        %v1529 = vsub.f32 %v1034, %v1528
        %v1530 = vand.u32 %v1529, 4294901760
        %1531 = vmatprep.subr.mxu0 %v1530
        %v1532 = vand.u32 %v1033, 4294901760
        %v1533 = vsub.f32 %v1033, %v1532
        %v1534 = vand.u32 %v1533, 4294901760
        %1535 = vmatpush1.msra.mxu0 %v1534
        %v1536 = vand.u32 %v1032, 4294901760
        %v1537 = vsub.f32 %v1032, %v1536
        %v1538 = vand.u32 %v1537, 4294901760
        %1539 = vmatprep.subr.mxu0 %v1538
        %v1540 = vand.u32 %v1031, 4294901760
        %v1541 = vsub.f32 %v1031, %v1540
        %v1542 = vand.u32 %v1541, 4294901760
        %1543 = vmatpush1.msra.mxu0 %v1542
        %1544 = vmatprep.subr.mxu0 0.0
        %1545 = vmatpush2.msra.mxu0 0.0
        %1546 = vmatprep.subr.mxu0 0.0
        %1547 = vmatpush2.msra.mxu0 0.0
        %1548 = vmatprep.subr.mxu0 0.0
        %1549 = vmatpush2.msra.mxu0 0.0
        %1550 = vmatprep.subr.mxu0 0.0
        %1551 = vmatpush2.msra.mxu0 0.0
        %1552 = vmatprep.subr.mxu0 0.0
        %1553 = vmatpush2.msra.mxu0 0.0
        %1554 = vmatprep.subr.mxu0 0.0
        %1555 = vmatpush2.msra.mxu0 0.0
        %1556 = vmatprep.subr.mxu0 0.0
        %1557 = vmatpush2.msra.mxu0 0.0
        %1558 = vmatprep.subr.mxu0 0.0
        %1559 = vmatpush2.msra.mxu0 0.0
        %1560 = vmatprep.subr.mxu0 0.0
        %1561 = vmatpush2.msra.mxu0 0.0
        %1562 = vmatprep.subr.mxu0 0.0
        %1563 = vmatpush2.msra.mxu0 0.0
        %1564 = vmatprep.subr.mxu0 0.0
        %1565 = vmatpush2.msra.mxu0 0.0
        %1566 = vmatprep.subr.mxu0 0.0
        %1567 = vmatpush2.msra.mxu0 0.0
        %1568 = vmatprep.subr.mxu0 0.0
        %1569 = vmatpush2.msra.mxu0 0.0
        %1570 = vmatprep.subr.mxu0 0.0
        %1571 = vmatpush2.msra.mxu0 0.0
        %1572 = vmatprep.subr.mxu0 0.0
        %1573 = vmatpush2.msra.mxu0 0.0
        %1574 = vmatprep.subr.mxu0 0.0
        %1575 = vmatpush2.msra.mxu0 0.0
        %1576 = vmatprep.mubr.f32.mxu0 0.0
        %v1577 = vand.u32 %v1060, 4294901760
        %1578 = vmatmul.mubr.f32.gmra.mxu0 %v1577
        %v1579 = vpop.f32.mrf.mxu0
        %v1580 = vadd.f32 %v1472, %v1579
        %v1581 = vpop.f32.mrf.mxu0
        %v1582 = vadd.f32 %v1474, %v1581
        %1583 = vmatprep.mubr.f32.mxu0 0.0
        %v1584 = vand.u32 %v1063, 4294901760
        %1585 = vmatmul.mubr.f32.gmra.mxu0 %v1584
        %v1586 = vpop.f32.mrf.mxu0
        %v1587 = vadd.f32 %v1481, %v1586
        %v1588 = vpop.f32.mrf.mxu0
        %v1589 = vadd.f32 %v1483, %v1588
        %1590 = vmatprep.mubr.f32.mxu0 0.0
        %v1591 = vand.u32 %v1066, 4294901760
        %1592 = vmatmul.mubr.f32.gmra.mxu0 %v1591
        %v1593 = vpop.f32.mrf.mxu0
        %v1594 = vadd.f32 %v1490, %v1593
        %v1595 = vpop.f32.mrf.mxu0
        %v1596 = vadd.f32 %v1492, %v1595
        %1597 = vdwg.mxu0
        %1598 = vmatprep.subr.mxu0 0.0
        %1599 = vmatpush1.msra.mxu0 0.0
        %1600 = vmatprep.subr.mxu0 0.0
        %1601 = vmatpush1.msra.mxu0 0.0
        %1602 = vmatprep.subr.mxu0 0.0
        %1603 = vmatpush1.msra.mxu0 0.0
        %1604 = vmatprep.subr.mxu0 0.0
        %1605 = vmatpush1.msra.mxu0 0.0
        %1606 = vmatprep.subr.mxu0 0.0
        %1607 = vmatpush1.msra.mxu0 0.0
        %1608 = vmatprep.subr.mxu0 0.0
        %1609 = vmatpush1.msra.mxu0 0.0
        %1610 = vmatprep.subr.mxu0 0.0
        %1611 = vmatpush1.msra.mxu0 0.0
        %1612 = vmatprep.subr.mxu0 0.0
        %1613 = vmatpush1.msra.mxu0 0.0
        %1614 = vmatprep.subr.mxu0 0.0
        %1615 = vmatpush1.msra.mxu0 0.0
        %1616 = vmatprep.subr.mxu0 0.0
        %1617 = vmatpush1.msra.mxu0 0.0
        %1618 = vmatprep.subr.mxu0 0.0
        %1619 = vmatpush1.msra.mxu0 0.0
        %1620 = vmatprep.subr.mxu0 0.0
        %1621 = vmatpush1.msra.mxu0 0.0
        %1622 = vmatprep.subr.mxu0 0.0
        %1623 = vmatpush1.msra.mxu0 0.0
        %v1624 = vand.u32 %v1073, 4294901760
        %1625 = vmatprep.subr.mxu0 %v1624
        %v1626 = vand.u32 %v1070, 4294901760
        %1627 = vmatpush1.msra.mxu0 %v1626
        %v1628 = vand.u32 %v1034, 4294901760
        %1629 = vmatprep.subr.mxu0 %v1628
        %v1630 = vand.u32 %v1033, 4294901760
        %1631 = vmatpush1.msra.mxu0 %v1630
        %v1632 = vand.u32 %v1032, 4294901760
        %1633 = vmatprep.subr.mxu0 %v1632
        %v1634 = vand.u32 %v1031, 4294901760
        %1635 = vmatpush1.msra.mxu0 %v1634
        %1636 = vmatprep.subr.mxu0 0.0
        %1637 = vmatpush2.msra.mxu0 0.0
        %1638 = vmatprep.subr.mxu0 0.0
        %1639 = vmatpush2.msra.mxu0 0.0
        %1640 = vmatprep.subr.mxu0 0.0
        %1641 = vmatpush2.msra.mxu0 0.0
        %1642 = vmatprep.subr.mxu0 0.0
        %1643 = vmatpush2.msra.mxu0 0.0
        %1644 = vmatprep.subr.mxu0 0.0
        %1645 = vmatpush2.msra.mxu0 0.0
        %1646 = vmatprep.subr.mxu0 0.0
        %1647 = vmatpush2.msra.mxu0 0.0
        %1648 = vmatprep.subr.mxu0 0.0
        %1649 = vmatpush2.msra.mxu0 0.0
        %1650 = vmatprep.subr.mxu0 0.0
        %1651 = vmatpush2.msra.mxu0 0.0
        %1652 = vmatprep.subr.mxu0 0.0
        %1653 = vmatpush2.msra.mxu0 0.0
        %1654 = vmatprep.subr.mxu0 0.0
        %1655 = vmatpush2.msra.mxu0 0.0
        %1656 = vmatprep.subr.mxu0 0.0
        %1657 = vmatpush2.msra.mxu0 0.0
        %1658 = vmatprep.subr.mxu0 0.0
        %1659 = vmatpush2.msra.mxu0 0.0
        %1660 = vmatprep.subr.mxu0 0.0
        %1661 = vmatpush2.msra.mxu0 0.0
        %1662 = vmatprep.subr.mxu0 0.0
        %1663 = vmatpush2.msra.mxu0 0.0
        %1664 = vmatprep.subr.mxu0 0.0
        %1665 = vmatpush2.msra.mxu0 0.0
        %1666 = vmatprep.subr.mxu0 0.0
        %1667 = vmatpush2.msra.mxu0 0.0
        %1668 = vmatprep.mubr.f32.mxu0 0.0
        %v1669 = vand.u32 %v1060, 4294901760
        %1670 = vmatmul.mubr.f32.gmra.mxu0 %v1669
        %v1671 = vpop.f32.mrf.mxu0
        %v1672 = vadd.f32 %v1580, %v1671
        %v1673 = vpop.f32.mrf.mxu0
        %v1674 = vadd.f32 %v1582, %v1673
        %1675 = vmatprep.mubr.f32.mxu0 0.0
        %v1676 = vand.u32 %v1063, 4294901760
        %1677 = vmatmul.mubr.f32.gmra.mxu0 %v1676
        %v1678 = vpop.f32.mrf.mxu0
        %v1679 = vadd.f32 %v1587, %v1678
        %v1680 = vpop.f32.mrf.mxu0
        %v1681 = vadd.f32 %v1589, %v1680
        %1682 = vmatprep.mubr.f32.mxu0 0.0
        %v1683 = vand.u32 %v1066, 4294901760
        %1684 = vmatmul.mubr.f32.gmra.mxu0 %v1683
        %v1685 = vpop.f32.mrf.mxu0
        %v1686 = vadd.f32 %v1594, %v1685
        %v1687 = vpop.f32.mrf.mxu0
        %v1688 = vadd.f32 %v1596, %v1687
        %1689 = vdwg.mxu0
        %v1690 = vxor.u32 %v1672, 2147483648
        %v1691 = vxor.u32 %v1674, 2147483648
        %v1692 = vxor.u32 %v1679, 2147483648
        %v1693 = vxor.u32 %v1681, 2147483648
        %v1694 = vxor.u32 %v1686, 2147483648
        %v1695 = vxor.u32 %v1688, 2147483648
        %v1696 = vmul.f32 %v1690, 1.442695
        %v1697 = vpow.pop %v1696
        %v1698 = vmul.f32 %v1691, 1.442695
        %v1699 = vpow.pop %v1698
        %v1700 = vmul.f32 %v1692, 1.442695
        %v1701 = vpow.pop %v1700
        %v1702 = vmul.f32 %v1693, 1.442695
        %v1703 = vpow.pop %v1702
        %v1704 = vmul.f32 %v1694, 1.442695
        %v1705 = vpow.pop %v1704
        %v1706 = vmul.f32 %v1695, 1.442695
        %v1707 = vpow.pop %v1706
        %v1708 = vadd.f32 %v1697, 1.0
        %v1709 = vadd.f32 %v1699, 1.0
        %v1710 = vadd.f32 %v1701, 1.0
        %v1711 = vadd.f32 %v1703, 1.0
        %v1712 = vadd.f32 %v1705, 1.0
        %v1713 = vadd.f32 %v1707, 1.0
        %v1714 = vrcp.pop %v1708
        %v1715 = vmul.f32 1.0, %v1714
        %v1716 = vrcp.pop %v1709
        %v1717 = vmul.f32 1.0, %v1716
        %v1718 = vrcp.pop %v1710
        %v1719 = vmul.f32 1.0, %v1718
        %v1720 = vrcp.pop %v1711
        %v1721 = vmul.f32 1.0, %v1720
        %v1722 = vrcp.pop %v1712
        %v1723 = vmul.f32 1.0, %v1722
        %v1724 = vrcp.pop %v1713
        %v1725 = vmul.f32 1.0, %v1724
        %1726 = vst [vmem:[%s372] sm:$0xff] %v1715
        %1727 = vst [vmem:[%s372 + $0x8] sm:$0xff] %v1717
        %1728 = vst [vmem:[%s372 + $0x10] sm:$0xff] %v1719
        %1729 = vst [vmem:[%s372 + $0x18] sm:$0xff] %v1721
        %1730 = vst [vmem:[%s372 + $0x20] sm:$0x3] %v1723
        %1731 = vst [vmem:[%s372 + $0x28] sm:$0x3] %v1725
        %s1732 = sand.u32 %s208, 1
        %s1733 = sand.u32 %s208, 1
        %s1734 = smul.addr %s1733, 48
        %s1735 = scalar_lea.vmem [#allocation3], %s1734
        // Predicated region
        $region72: #{tpu_custom_call.1} parent=66 // pred_check
          %p1736 = pneg %p218
        $region73: #{tpu_custom_call.1} parent=66 // pred_check_branch
          %1738 = sbr.rel (%p1736) target = $region75
        $region74: #{tpu_custom_call.1} parent=66 // pred_region
          %s1739 = smul.u32 2, %s23
          %s1740 = smul.addr %s22, 24
          %s1741 = sadd.s32 %s1739, %s1740
          %s1742 = smul.addr %s1741, 8
          %s1743 = scalar_lea.vmem %s7, %s1742
          // Predicated region
          $region76: #{tpu_custom_call.1} parent=74 // pred_check
            _
          $region77: #{tpu_custom_call.1} parent=74 // pred_check_branch
            %1745 = sbr.rel (0) target = $region79
          $region78: #{tpu_custom_call.1} parent=74 // pred_region
            // Predicated region
            $region80: #{tpu_custom_call.1} parent=78 // pred_check
              _
            $region81: #{tpu_custom_call.1} parent=78 // pred_check_branch
              %1747 = sbr.rel (0) target = $region83
            $region82: #{tpu_custom_call.1} parent=78 // pred_region
              loop: start=0, step=1, limit=1
              $region84: #{tpu_custom_call.1} parent=82 // loop_pre_header
                _
              $region85: #{tpu_custom_call.1} parent=82 // loop_header
                %s1749 = sphi 0, %s1753
                %p1750 = scmp.ge.s32.totalorder %s1749, 1
                %s1754 = sphi %s1735, %s1735
                %s1755 = sphi %s1743, %s1743
              $region86: #{tpu_custom_call.1} parent=82 // loop_header_branch
                %1752 = sbr.rel (%p1750) target = $region90
              $region87: #{tpu_custom_call.1} parent=82 // loop_body
                %v1756 = vld [vmem:[%s1754] sm:$0xff]
                %1757 = vst [vmem:[%s1755] sm:$0xff] %v1756
                %v1758 = vld [vmem:[%s1754 + $0x8] sm:$0xff]
                %1759 = vst [vmem:[%s1755 + $0x8] sm:$0xff] %v1758
                %v1760 = vld [vmem:[%s1754 + $0x10] sm:$0xff]
                %1761 = vst [vmem:[%s1755 + $0x40] sm:$0xff] %v1760
                %v1762 = vld [vmem:[%s1754 + $0x18] sm:$0xff]
                %1763 = vst [vmem:[%s1755 + $0x48] sm:$0xff] %v1762
                %v1764 = vld [vmem:[%s1754 + $0x20] sm:$0xff]
                %1765 = vst [vmem:[%s1755 + $0x80] sm:$0xff] %v1764
                %v1766 = vld [vmem:[%s1754 + $0x28] sm:$0xff]
                %1767 = vst [vmem:[%s1755 + $0x88] sm:$0xff] %v1766
              $region88: #{tpu_custom_call.1} parent=82 // loop_footer
                %s1753 = sadd.s32 1, %s1749
              $region89: #{tpu_custom_call.1} parent=82 // loop_footer_branch
                %1748 = sbr.rel target = $region85
              $region90: #{tpu_custom_call.1} parent=82 // loop_exit
                _
            $region83: #{tpu_custom_call.1} parent=78 // pred_fallthru
              _
            // Predicated region
            $region91: #{tpu_custom_call.1} parent=78 // pred_check
              _
            $region92: #{tpu_custom_call.1} parent=78 // pred_check_branch
              %1769 = sbr.rel target = $region94
            $region93: #{tpu_custom_call.1} parent=78 // pred_region
              _
            $region94: #{tpu_custom_call.1} parent=78 // pred_fallthru
              _
          $region79: #{tpu_custom_call.1} parent=74 // pred_fallthru
            _
          %1770 = vnop
        $region75: #{tpu_custom_call.1} parent=66 // pred_fallthru
          _
      $region67: #{tpu_custom_call.1} parent=5 // pred_fallthru
        _
      %p1771 = scmp.le.s32.totalorder 2, %s13
      // Predicated region
      $region95: #{tpu_custom_call.1} parent=5 // pred_check
        %p1772 = pneg %p1771
      $region96: #{tpu_custom_call.1} parent=5 // pred_check_branch
        %1774 = sbr.rel (%p1772) target = $region98
      $region97: #{tpu_custom_call.1} parent=5 // pred_region
        %s1775 = ssub.s32 %s13, 2
        // Predicated region
        $region99: #{tpu_custom_call.1} parent=97 // pred_check
          %p1776 = pneg %p224
        $region100: #{tpu_custom_call.1} parent=97 // pred_check_branch
          %1778 = sbr.rel (%p1776) target = $region102
        $region101: #{tpu_custom_call.1} parent=97 // pred_region
          %s1779 = sand.u32 %s209, 1
          %s1780 = sand.u32 %s209, 1
          %s1781 = smul.addr %s1780, 48
          %s1782 = scalar_lea.vmem [#allocation3], %s1781
        $region102: #{tpu_custom_call.1} parent=97 // pred_fallthru
          _
      $region98: #{tpu_custom_call.1} parent=5 // pred_fallthru
        _
    $region6: #{tpu_custom_call.1} parent=1 // loop_footer
      %s17 = sadd.s32 1, %s13
    $region7: #{tpu_custom_call.1} parent=1 // loop_footer_branch
      %12 = sbr.rel target = $region3
    $region8: #{tpu_custom_call.1} parent=1 // loop_exit
      _

</llo_original>
